<compile_context>
chip_gen: v7x
topology: tpu7x:2x2x1
jax: 0.10.0
libtpu: 0.0.40
codegen_flags: <defaults>
</compile_context>

<pallas_src>
import functools

import jax
import jax.numpy as jnp
from jax.experimental import pallas as pl
from jax.experimental.pallas import tpu as pltpu


# -----------------------------------------------------------------------------
# Model dimensions
# -----------------------------------------------------------------------------
IN_DIM = 16      # raw node feature dim
HIDDEN = 32      # encoder / post-aggregation width
S_DIM = 4        # learned coordinate space dim
F_LR = 16        # learned propagated feature dim
OUT_DIM = 8      # per-node output dim


# -----------------------------------------------------------------------------
# Fused forward kernel (one graph per grid step, everything resident in VMEM)
# -----------------------------------------------------------------------------
def _fused_forward_kernel(
        feats_ref, noise_ref,
        w_in_ref, b_in_ref,
        w_sf_ref, b_sf_ref,
        wp_h_ref, wp_mean_ref, wp_max_ref, b_post_ref,
        w_out_ref, b_out_ref,
        out_ref, *, s_dim, f_lr, n_nodes):
    # ---- step-dependent noise injection (fused, no HBM intermediate) ----
    x = feats_ref[0] + noise_ref[0]                                   # (N, IN)

    # ---- input encoder: Linear + ELU ----
    h0 = jnp.dot(x, w_in_ref[...], preferred_element_type=jnp.float32)
    h0 = h0 + b_in_ref[...]
    h0 = jnp.where(h0 > 0.0, h0, jnp.exp(h0) - 1.0)                   # ELU

    # ---- GravNet projections: one fused matmul producing [S | F_LR] ----
    sf = jnp.dot(h0, w_sf_ref[...], preferred_element_type=jnp.float32)
    sf = sf + b_sf_ref[...]
    s = sf[:, :s_dim]                                                 # (N, S)
    f = sf[:, s_dim:]                                                 # (N, F)

    # ---- pairwise squared distances via the Gram matrix (MXU) ----
    st = s.T                                                          # (S, N)
    gram = jnp.dot(s, st, preferred_element_type=jnp.float32)         # (N, N)
    sq_col = jnp.sum(s * s, axis=1, keepdims=True)                    # (N, 1)
    sq_row = jnp.sum(st * st, axis=0, keepdims=True)                  # (1, N)
    d2 = jnp.maximum(sq_col + sq_row - 2.0 * gram, 0.0)               # (N, N)

    # GravNet potential (symmetric).
    w = jnp.exp(-10.0 * d2)                                           # (N, N)

    # ---- weighted-mean aggregation (single MXU matmul) ----
    agg_mean = jnp.dot(w, f, preferred_element_type=jnp.float32) * (
        1.0 / jnp.float32(n_nodes))                                   # (N, F)

    # ---- weighted-max aggregation, lane-dense ----
    # w is symmetric, so max_j w[i,j] * f[j,k]  ==  max over axis 0 of
    # (w * f[:, k]), which yields a lane-dense (1, N) row per channel.
    rows = []
    for k in range(f_lr):
        wk = w * f[:, k:k + 1]                                        # (N, N)
        rows.append(jnp.max(wk, axis=0, keepdims=True))               # (1, N)
    agg_max = jnp.concatenate(rows, axis=0).T                         # (N, F)

    # ---- post layer: ELU(h0 @ Wp_h + mean @ Wp_mean + max @ Wp_max + b) ----
    # (replaces the jnp.concatenate([h0, mean, max]) @ w_post formulation)
    h1 = jnp.dot(h0, wp_h_ref[...], preferred_element_type=jnp.float32)
    h1 = h1 + jnp.dot(agg_mean, wp_mean_ref[...],
                      preferred_element_type=jnp.float32)
    h1 = h1 + jnp.dot(agg_max, wp_max_ref[...],
                      preferred_element_type=jnp.float32)
    h1 = h1 + b_post_ref[...]
    h1 = jnp.where(h1 > 0.0, h1, jnp.exp(h1) - 1.0)                   # ELU

    # ---- per-node output head ----
    out = jnp.dot(h1, w_out_ref[...], preferred_element_type=jnp.float32)
    out = out + b_out_ref[...]
    out_ref[0] = out.astype(out_ref.dtype)


# -----------------------------------------------------------------------------
# Parameters + wrapper
# -----------------------------------------------------------------------------
def init_params(key):
    ks = jax.random.split(key, 10)
    return {
        "w_in":   0.1 * jax.random.normal(ks[0], (IN_DIM, HIDDEN), jnp.float32),
        "b_in":   jnp.zeros((HIDDEN,), jnp.float32),
        "w_s":    0.1 * jax.random.normal(ks[1], (HIDDEN, S_DIM), jnp.float32),
        "b_s":    jnp.zeros((S_DIM,), jnp.float32),
        "w_flr":  0.1 * jax.random.normal(ks[2], (HIDDEN, F_LR), jnp.float32),
        "b_flr":  jnp.zeros((F_LR,), jnp.float32),
        "w_post": 0.1 * jax.random.normal(ks[3], (HIDDEN + 2 * F_LR, HIDDEN),
                                          jnp.float32),
        "b_post": jnp.zeros((HIDDEN,), jnp.float32),
        "w_out":  0.1 * jax.random.normal(ks[4], (HIDDEN, OUT_DIM), jnp.float32),
        "b_out":  jnp.zeros((OUT_DIM,), jnp.float32),
    }


def gravnet_forward(params, node_feats, step_count, noise_key):
    """Equivalent of GraphTransformerNetWrapper.forward(g, step_count).

    node_feats : (B, N, IN_DIM) dense per-node features for B graphs/events.
    step_count : scalar training-step counter controlling the injected noise.
    """
    B, N, _ = node_feats.shape

    # Step-dependent noise tensor (the add itself happens inside the kernel).
    noise_scale = 0.1 / (1.0 + jnp.float32(step_count))
    noise = noise_scale * jax.random.normal(noise_key, node_feats.shape,
                                            jnp.float32)

    # One-time weight repacking (trace-time, negligible):
    #   fused [S | F_LR] projection and row-split of w_post.
    w_sf = jnp.concatenate([params["w_s"], params["w_flr"]], axis=1)
    b_sf = jnp.concatenate([params["b_s"], params["b_flr"]], axis=0)
    wp_h = params["w_post"][:HIDDEN]
    wp_mean = params["w_post"][HIDDEN:HIDDEN + F_LR]
    wp_max = params["w_post"][HIDDEN + F_LR:]

    kernel = functools.partial(_fused_forward_kernel,
                               s_dim=S_DIM, f_lr=F_LR, n_nodes=N)
    full = lambda b: (0, 0)          # weights / biases: one un-tiled block
    per_graph = lambda b: (b, 0, 0)  # per-graph tensors: batch axis on grid

    return pl.pallas_call(
        kernel,
        out_shape=jax.ShapeDtypeStruct((B, N, OUT_DIM), jnp.float32),
        grid=(B,),
        in_specs=[
            pl.BlockSpec((1, N, IN_DIM), per_graph),            # node_feats
            pl.BlockSpec((1, N, IN_DIM), per_graph),            # noise
            pl.BlockSpec((IN_DIM, HIDDEN), full),               # w_in
            pl.BlockSpec((1, HIDDEN), full),                    # b_in
            pl.BlockSpec((HIDDEN, S_DIM + F_LR), full),         # w_sf
            pl.BlockSpec((1, S_DIM + F_LR), full),              # b_sf
            pl.BlockSpec((HIDDEN, HIDDEN), full),               # wp_h
            pl.BlockSpec((F_LR, HIDDEN), full),                 # wp_mean
            pl.BlockSpec((F_LR, HIDDEN), full),                 # wp_max
            pl.BlockSpec((1, HIDDEN), full),                    # b_post
            pl.BlockSpec((HIDDEN, OUT_DIM), full),              # w_out
            pl.BlockSpec((1, OUT_DIM), full),                   # b_out
        ],
        out_specs=pl.BlockSpec((1, N, OUT_DIM), per_graph),
        compiler_params=pltpu.CompilerParams(
            dimension_semantics=("parallel",)),
    )(
        node_feats.astype(jnp.float32),
        noise,
        params["w_in"], params["b_in"].reshape(1, HIDDEN),
        w_sf, b_sf.reshape(1, S_DIM + F_LR),
        wp_h, wp_mean, wp_max, params["b_post"].reshape(1, HIDDEN),
        params["w_out"], params["b_out"].reshape(1, OUT_DIM),
    )


# -----------------------------------------------------------------------------
# Driver
# -----------------------------------------------------------------------------
if __name__ == "__main__":
    key = jax.random.PRNGKey(0)
    k_param, k_feat, k_noise = jax.random.split(key, 3)

    B_GRAPHS = 2
    N_NODES = 64
    node_feats = jax.random.normal(k_feat, (B_GRAPHS, N_NODES, IN_DIM),
                                   jnp.float32)
    step_count = 3

    params = init_params(k_param)

    out = gravnet_forward(params, node_feats, step_count, k_noise)
    out = jax.block_until_ready(out)

    assert out.shape == (B_GRAPHS, N_NODES, OUT_DIM), out.shape
    assert out.dtype == jnp.float32
    assert bool(jnp.all(jnp.isfinite(out)))
    print("KERNEL_OK")
</pallas_src>

<mosaic_0001>
module attributes {stable_mosaic.version = 11 : i64} {
  func.func @_fused_forward_kernel(%arg0: i32, %arg1: memref<1x64x16xf32, #tpu.memory_space<vmem>>, %arg2: memref<1x64x16xf32, #tpu.memory_space<vmem>>, %arg3: memref<16x32xf32, #tpu.memory_space<vmem>>, %arg4: memref<1x32xf32, #tpu.memory_space<vmem>>, %arg5: memref<32x20xf32, #tpu.memory_space<vmem>>, %arg6: memref<1x20xf32, #tpu.memory_space<vmem>>, %arg7: memref<32x32xf32, #tpu.memory_space<vmem>>, %arg8: memref<16x32xf32, #tpu.memory_space<vmem>>, %arg9: memref<16x32xf32, #tpu.memory_space<vmem>>, %arg10: memref<1x32xf32, #tpu.memory_space<vmem>>, %arg11: memref<32x8xf32, #tpu.memory_space<vmem>>, %arg12: memref<1x8xf32, #tpu.memory_space<vmem>>, %arg13: memref<1x64x8xf32, #tpu.memory_space<vmem>>) attributes {dimension_semantics = [#tpu.dimension_semantics<parallel>], iteration_bounds = array<i64: 2>, scalar_prefetch = 0 : i64, scratch_operands = 0 : i64, tpu.core_type = #tpu.core_type<tc>, window_params = [{transform_indices = @transform_0, window_bounds = array<i64: 1, 64, 16>}, {transform_indices = @transform_1, window_bounds = array<i64: 1, 64, 16>}, {pipeline_mode = #tpu.pipeline_mode<synchronous>, transform_indices = @transform_2, window_bounds = array<i64: 16, 32>}, {pipeline_mode = #tpu.pipeline_mode<synchronous>, transform_indices = @transform_3, window_bounds = array<i64: 1, 32>}, {pipeline_mode = #tpu.pipeline_mode<synchronous>, transform_indices = @transform_4, window_bounds = array<i64: 32, 20>}, {pipeline_mode = #tpu.pipeline_mode<synchronous>, transform_indices = @transform_5, window_bounds = array<i64: 1, 20>}, {pipeline_mode = #tpu.pipeline_mode<synchronous>, transform_indices = @transform_6, window_bounds = array<i64: 32, 32>}, {pipeline_mode = #tpu.pipeline_mode<synchronous>, transform_indices = @transform_7, window_bounds = array<i64: 16, 32>}, {pipeline_mode = #tpu.pipeline_mode<synchronous>, transform_indices = @transform_8, window_bounds = array<i64: 16, 32>}, {pipeline_mode = #tpu.pipeline_mode<synchronous>, transform_indices = @transform_9, window_bounds = array<i64: 1, 32>}, {pipeline_mode = #tpu.pipeline_mode<synchronous>, transform_indices = @transform_10, window_bounds = array<i64: 32, 8>}, {pipeline_mode = #tpu.pipeline_mode<synchronous>, transform_indices = @transform_11, window_bounds = array<i64: 1, 8>}, {transform_indices = @transform_12, window_bounds = array<i64: 1, 64, 8>}]} {
    %c0 = arith.constant 0 : index
    %c0_0 = arith.constant 0 : index
    %c0_1 = arith.constant 0 : index
    %0 = vector.load %arg1[%c0, %c0_0, %c0_1] : memref<1x64x16xf32, #tpu.memory_space<vmem>>, vector<1x64x16xf32>
    %1 = vector.shape_cast %0 : vector<1x64x16xf32> to vector<64x16xf32>
    %c0_2 = arith.constant 0 : index
    %c0_3 = arith.constant 0 : index
    %c0_4 = arith.constant 0 : index
    %2 = vector.load %arg2[%c0_2, %c0_3, %c0_4] : memref<1x64x16xf32, #tpu.memory_space<vmem>>, vector<1x64x16xf32>
    %3 = vector.shape_cast %2 : vector<1x64x16xf32> to vector<64x16xf32>
    %4 = arith.addf %1, %3 : vector<64x16xf32>
    %c0_5 = arith.constant 0 : index
    %c0_6 = arith.constant 0 : index
    %5 = vector.load %arg3[%c0_5, %c0_6] : memref<16x32xf32, #tpu.memory_space<vmem>>, vector<16x32xf32>
    %cst = arith.constant dense<0.000000e+00> : vector<64x32xf32>
    %6 = tpu.matmul %4, %5, %cst {dimension_numbers = #tpu.dot_dimension_numbers<[1], [0], [0], [1], [0, 0, 1, 1], [], []>} : vector<64x16xf32>, vector<16x32xf32>, vector<64x32xf32> -> vector<64x32xf32>
    %c0_7 = arith.constant 0 : index
    %c0_8 = arith.constant 0 : index
    %7 = vector.load %arg4[%c0_7, %c0_8] : memref<1x32xf32, #tpu.memory_space<vmem>>, vector<1x32xf32>
    %8 = vector.broadcast %7 : vector<1x32xf32> to vector<64x32xf32>
    %9 = arith.addf %6, %8 : vector<64x32xf32>
    %cst_9 = arith.constant 0.000000e+00 : f32
    %10 = vector.broadcast %cst_9 : f32 to vector<64x32xf32>
    %11 = arith.cmpf ogt, %9, %10 : vector<64x32xf32>
    %12 = math.exp %9 : vector<64x32xf32>
    %cst_10 = arith.constant 1.000000e+00 : f32
    %13 = vector.broadcast %cst_10 : f32 to vector<64x32xf32>
    %14 = arith.subf %12, %13 : vector<64x32xf32>
    %15 = arith.select %11, %9, %14 : vector<64x32xi1>, vector<64x32xf32>
    %c0_11 = arith.constant 0 : index
    %c0_12 = arith.constant 0 : index
    %16 = vector.load %arg5[%c0_11, %c0_12] : memref<32x20xf32, #tpu.memory_space<vmem>>, vector<32x20xf32>
    %cst_13 = arith.constant dense<0.000000e+00> : vector<64x20xf32>
    %17 = tpu.matmul %15, %16, %cst_13 {dimension_numbers = #tpu.dot_dimension_numbers<[1], [0], [0], [1], [0, 0, 1, 1], [], []>} : vector<64x32xf32>, vector<32x20xf32>, vector<64x20xf32> -> vector<64x20xf32>
    %c0_14 = arith.constant 0 : index
    %c0_15 = arith.constant 0 : index
    %18 = vector.load %arg6[%c0_14, %c0_15] : memref<1x20xf32, #tpu.memory_space<vmem>>, vector<1x20xf32>
    %19 = vector.broadcast %18 : vector<1x20xf32> to vector<64x20xf32>
    %20 = arith.addf %17, %19 : vector<64x20xf32>
    %21 = vector.extract_strided_slice %20 {offsets = [0, 0], sizes = [64, 4], strides = [1, 1]} : vector<64x20xf32> to vector<64x4xf32>
    %22 = vector.extract_strided_slice %20 {offsets = [0, 4], sizes = [64, 16], strides = [1, 1]} : vector<64x20xf32> to vector<64x16xf32>
    %23 = tpu.transpose %21, [1, 0] : vector<64x4xf32> -> vector<4x64xf32>
    %cst_16 = arith.constant dense<0.000000e+00> : vector<64x64xf32>
    %24 = tpu.matmul %21, %23, %cst_16 {dimension_numbers = #tpu.dot_dimension_numbers<[1], [0], [0], [1], [0, 0, 1, 1], [], []>} : vector<64x4xf32>, vector<4x64xf32>, vector<64x64xf32> -> vector<64x64xf32>
    %25 = arith.mulf %21, %21 : vector<64x4xf32>
    %cst_17 = arith.constant dense<0.000000e+00> : vector<64xf32>
    %26 = vector.multi_reduction <add>, %25, %cst_17 [1] : vector<64x4xf32> to vector<64xf32>
    %27 = vector.shape_cast %26 : vector<64xf32> to vector<64x1xf32>
    %28 = arith.mulf %23, %23 : vector<4x64xf32>
    %cst_18 = arith.constant dense<0.000000e+00> : vector<64xf32>
    %29 = vector.multi_reduction <add>, %28, %cst_18 [0] : vector<4x64xf32> to vector<64xf32>
    %30 = vector.shape_cast %29 : vector<64xf32> to vector<1x64xf32>
    %31 = vector.broadcast %27 : vector<64x1xf32> to vector<64x64xf32>
    %32 = vector.broadcast %30 : vector<1x64xf32> to vector<64x64xf32>
    %33 = arith.addf %31, %32 : vector<64x64xf32>
    %cst_19 = arith.constant 2.000000e+00 : f32
    %34 = vector.broadcast %cst_19 : f32 to vector<64x64xf32>
    %35 = arith.mulf %34, %24 : vector<64x64xf32>
    %36 = arith.subf %33, %35 : vector<64x64xf32>
    %cst_20 = arith.constant 0.000000e+00 : f32
    %37 = vector.broadcast %cst_20 : f32 to vector<64x64xf32>
    %38 = arith.maximumf %36, %37 : vector<64x64xf32>
    %cst_21 = arith.constant -1.000000e+01 : f32
    %39 = vector.broadcast %cst_21 : f32 to vector<64x64xf32>
    %40 = arith.mulf %39, %38 : vector<64x64xf32>
    %41 = math.exp %40 : vector<64x64xf32>
    %cst_22 = arith.constant dense<0.000000e+00> : vector<64x16xf32>
    %42 = tpu.matmul %41, %22, %cst_22 {dimension_numbers = #tpu.dot_dimension_numbers<[1], [0], [0], [1], [0, 0, 1, 1], [], []>} : vector<64x64xf32>, vector<64x16xf32>, vector<64x16xf32> -> vector<64x16xf32>
    %cst_23 = arith.constant 1.000000e+00 : f32
    %cst_24 = arith.constant 6.400000e+01 : f32
    %43 = arith.divf %cst_23, %cst_24 : f32
    %44 = vector.broadcast %43 : f32 to vector<64x16xf32>
    %45 = arith.mulf %42, %44 : vector<64x16xf32>
    %46 = vector.extract_strided_slice %22 {offsets = [0, 0], sizes = [64, 1], strides = [1, 1]} : vector<64x16xf32> to vector<64x1xf32>
    %47 = vector.broadcast %46 : vector<64x1xf32> to vector<64x64xf32>
    %48 = arith.mulf %41, %47 : vector<64x64xf32>
    %cst_25 = arith.constant dense<0xFF800000> : vector<64xf32>
    %49 = vector.multi_reduction <maximumf>, %48, %cst_25 [0] : vector<64x64xf32> to vector<64xf32>
    %50 = vector.shape_cast %49 : vector<64xf32> to vector<1x64xf32>
    %51 = vector.extract_strided_slice %22 {offsets = [0, 1], sizes = [64, 1], strides = [1, 1]} : vector<64x16xf32> to vector<64x1xf32>
    %52 = vector.broadcast %51 : vector<64x1xf32> to vector<64x64xf32>
    %53 = arith.mulf %41, %52 : vector<64x64xf32>
    %cst_26 = arith.constant dense<0xFF800000> : vector<64xf32>
    %54 = vector.multi_reduction <maximumf>, %53, %cst_26 [0] : vector<64x64xf32> to vector<64xf32>
    %55 = vector.shape_cast %54 : vector<64xf32> to vector<1x64xf32>
    %56 = vector.extract_strided_slice %22 {offsets = [0, 2], sizes = [64, 1], strides = [1, 1]} : vector<64x16xf32> to vector<64x1xf32>
    %57 = vector.broadcast %56 : vector<64x1xf32> to vector<64x64xf32>
    %58 = arith.mulf %41, %57 : vector<64x64xf32>
    %cst_27 = arith.constant dense<0xFF800000> : vector<64xf32>
    %59 = vector.multi_reduction <maximumf>, %58, %cst_27 [0] : vector<64x64xf32> to vector<64xf32>
    %60 = vector.shape_cast %59 : vector<64xf32> to vector<1x64xf32>
    %61 = vector.extract_strided_slice %22 {offsets = [0, 3], sizes = [64, 1], strides = [1, 1]} : vector<64x16xf32> to vector<64x1xf32>
    %62 = vector.broadcast %61 : vector<64x1xf32> to vector<64x64xf32>
    %63 = arith.mulf %41, %62 : vector<64x64xf32>
    %cst_28 = arith.constant dense<0xFF800000> : vector<64xf32>
    %64 = vector.multi_reduction <maximumf>, %63, %cst_28 [0] : vector<64x64xf32> to vector<64xf32>
    %65 = vector.shape_cast %64 : vector<64xf32> to vector<1x64xf32>
    %66 = vector.extract_strided_slice %22 {offsets = [0, 4], sizes = [64, 1], strides = [1, 1]} : vector<64x16xf32> to vector<64x1xf32>
    %67 = vector.broadcast %66 : vector<64x1xf32> to vector<64x64xf32>
    %68 = arith.mulf %41, %67 : vector<64x64xf32>
    %cst_29 = arith.constant dense<0xFF800000> : vector<64xf32>
    %69 = vector.multi_reduction <maximumf>, %68, %cst_29 [0] : vector<64x64xf32> to vector<64xf32>
    %70 = vector.shape_cast %69 : vector<64xf32> to vector<1x64xf32>
    %71 = vector.extract_strided_slice %22 {offsets = [0, 5], sizes = [64, 1], strides = [1, 1]} : vector<64x16xf32> to vector<64x1xf32>
    %72 = vector.broadcast %71 : vector<64x1xf32> to vector<64x64xf32>
    %73 = arith.mulf %41, %72 : vector<64x64xf32>
    %cst_30 = arith.constant dense<0xFF800000> : vector<64xf32>
    %74 = vector.multi_reduction <maximumf>, %73, %cst_30 [0] : vector<64x64xf32> to vector<64xf32>
    %75 = vector.shape_cast %74 : vector<64xf32> to vector<1x64xf32>
    %76 = vector.extract_strided_slice %22 {offsets = [0, 6], sizes = [64, 1], strides = [1, 1]} : vector<64x16xf32> to vector<64x1xf32>
    %77 = vector.broadcast %76 : vector<64x1xf32> to vector<64x64xf32>
    %78 = arith.mulf %41, %77 : vector<64x64xf32>
    %cst_31 = arith.constant dense<0xFF800000> : vector<64xf32>
    %79 = vector.multi_reduction <maximumf>, %78, %cst_31 [0] : vector<64x64xf32> to vector<64xf32>
    %80 = vector.shape_cast %79 : vector<64xf32> to vector<1x64xf32>
    %81 = vector.extract_strided_slice %22 {offsets = [0, 7], sizes = [64, 1], strides = [1, 1]} : vector<64x16xf32> to vector<64x1xf32>
    %82 = vector.broadcast %81 : vector<64x1xf32> to vector<64x64xf32>
    %83 = arith.mulf %41, %82 : vector<64x64xf32>
    %cst_32 = arith.constant dense<0xFF800000> : vector<64xf32>
    %84 = vector.multi_reduction <maximumf>, %83, %cst_32 [0] : vector<64x64xf32> to vector<64xf32>
    %85 = vector.shape_cast %84 : vector<64xf32> to vector<1x64xf32>
    %86 = vector.extract_strided_slice %22 {offsets = [0, 8], sizes = [64, 1], strides = [1, 1]} : vector<64x16xf32> to vector<64x1xf32>
    %87 = vector.broadcast %86 : vector<64x1xf32> to vector<64x64xf32>
    %88 = arith.mulf %41, %87 : vector<64x64xf32>
    %cst_33 = arith.constant dense<0xFF800000> : vector<64xf32>
    %89 = vector.multi_reduction <maximumf>, %88, %cst_33 [0] : vector<64x64xf32> to vector<64xf32>
    %90 = vector.shape_cast %89 : vector<64xf32> to vector<1x64xf32>
    %91 = vector.extract_strided_slice %22 {offsets = [0, 9], sizes = [64, 1], strides = [1, 1]} : vector<64x16xf32> to vector<64x1xf32>
    %92 = vector.broadcast %91 : vector<64x1xf32> to vector<64x64xf32>
    %93 = arith.mulf %41, %92 : vector<64x64xf32>
    %cst_34 = arith.constant dense<0xFF800000> : vector<64xf32>
    %94 = vector.multi_reduction <maximumf>, %93, %cst_34 [0] : vector<64x64xf32> to vector<64xf32>
    %95 = vector.shape_cast %94 : vector<64xf32> to vector<1x64xf32>
    %96 = vector.extract_strided_slice %22 {offsets = [0, 10], sizes = [64, 1], strides = [1, 1]} : vector<64x16xf32> to vector<64x1xf32>
    %97 = vector.broadcast %96 : vector<64x1xf32> to vector<64x64xf32>
    %98 = arith.mulf %41, %97 : vector<64x64xf32>
    %cst_35 = arith.constant dense<0xFF800000> : vector<64xf32>
    %99 = vector.multi_reduction <maximumf>, %98, %cst_35 [0] : vector<64x64xf32> to vector<64xf32>
    %100 = vector.shape_cast %99 : vector<64xf32> to vector<1x64xf32>
    %101 = vector.extract_strided_slice %22 {offsets = [0, 11], sizes = [64, 1], strides = [1, 1]} : vector<64x16xf32> to vector<64x1xf32>
    %102 = vector.broadcast %101 : vector<64x1xf32> to vector<64x64xf32>
    %103 = arith.mulf %41, %102 : vector<64x64xf32>
    %cst_36 = arith.constant dense<0xFF800000> : vector<64xf32>
    %104 = vector.multi_reduction <maximumf>, %103, %cst_36 [0] : vector<64x64xf32> to vector<64xf32>
    %105 = vector.shape_cast %104 : vector<64xf32> to vector<1x64xf32>
    %106 = vector.extract_strided_slice %22 {offsets = [0, 12], sizes = [64, 1], strides = [1, 1]} : vector<64x16xf32> to vector<64x1xf32>
    %107 = vector.broadcast %106 : vector<64x1xf32> to vector<64x64xf32>
    %108 = arith.mulf %41, %107 : vector<64x64xf32>
    %cst_37 = arith.constant dense<0xFF800000> : vector<64xf32>
    %109 = vector.multi_reduction <maximumf>, %108, %cst_37 [0] : vector<64x64xf32> to vector<64xf32>
    %110 = vector.shape_cast %109 : vector<64xf32> to vector<1x64xf32>
    %111 = vector.extract_strided_slice %22 {offsets = [0, 13], sizes = [64, 1], strides = [1, 1]} : vector<64x16xf32> to vector<64x1xf32>
    %112 = vector.broadcast %111 : vector<64x1xf32> to vector<64x64xf32>
    %113 = arith.mulf %41, %112 : vector<64x64xf32>
    %cst_38 = arith.constant dense<0xFF800000> : vector<64xf32>
    %114 = vector.multi_reduction <maximumf>, %113, %cst_38 [0] : vector<64x64xf32> to vector<64xf32>
    %115 = vector.shape_cast %114 : vector<64xf32> to vector<1x64xf32>
    %116 = vector.extract_strided_slice %22 {offsets = [0, 14], sizes = [64, 1], strides = [1, 1]} : vector<64x16xf32> to vector<64x1xf32>
    %117 = vector.broadcast %116 : vector<64x1xf32> to vector<64x64xf32>
    %118 = arith.mulf %41, %117 : vector<64x64xf32>
    %cst_39 = arith.constant dense<0xFF800000> : vector<64xf32>
    %119 = vector.multi_reduction <maximumf>, %118, %cst_39 [0] : vector<64x64xf32> to vector<64xf32>
    %120 = vector.shape_cast %119 : vector<64xf32> to vector<1x64xf32>
    %121 = vector.extract_strided_slice %22 {offsets = [0, 15], sizes = [64, 1], strides = [1, 1]} : vector<64x16xf32> to vector<64x1xf32>
    %122 = vector.broadcast %121 : vector<64x1xf32> to vector<64x64xf32>
    %123 = arith.mulf %41, %122 : vector<64x64xf32>
    %cst_40 = arith.constant dense<0xFF800000> : vector<64xf32>
    %124 = vector.multi_reduction <maximumf>, %123, %cst_40 [0] : vector<64x64xf32> to vector<64xf32>
    %125 = vector.shape_cast %124 : vector<64xf32> to vector<1x64xf32>
    %126 = tpu.concatenate %50, %55, %60, %65, %70, %75, %80, %85, %90, %95, %100, %105, %110, %115, %120, %125 in 0 : vector<1x64xf32>, vector<1x64xf32>, vector<1x64xf32>, vector<1x64xf32>, vector<1x64xf32>, vector<1x64xf32>, vector<1x64xf32>, vector<1x64xf32>, vector<1x64xf32>, vector<1x64xf32>, vector<1x64xf32>, vector<1x64xf32>, vector<1x64xf32>, vector<1x64xf32>, vector<1x64xf32>, vector<1x64xf32> -> vector<16x64xf32>
    %127 = tpu.transpose %126, [1, 0] : vector<16x64xf32> -> vector<64x16xf32>
    %c0_41 = arith.constant 0 : index
    %c0_42 = arith.constant 0 : index
    %128 = vector.load %arg7[%c0_41, %c0_42] : memref<32x32xf32, #tpu.memory_space<vmem>>, vector<32x32xf32>
    %cst_43 = arith.constant dense<0.000000e+00> : vector<64x32xf32>
    %129 = tpu.matmul %15, %128, %cst_43 {dimension_numbers = #tpu.dot_dimension_numbers<[1], [0], [0], [1], [0, 0, 1, 1], [], []>} : vector<64x32xf32>, vector<32x32xf32>, vector<64x32xf32> -> vector<64x32xf32>
    %c0_44 = arith.constant 0 : index
    %c0_45 = arith.constant 0 : index
    %130 = vector.load %arg8[%c0_44, %c0_45] : memref<16x32xf32, #tpu.memory_space<vmem>>, vector<16x32xf32>
    %cst_46 = arith.constant dense<0.000000e+00> : vector<64x32xf32>
    %131 = tpu.matmul %45, %130, %cst_46 {dimension_numbers = #tpu.dot_dimension_numbers<[1], [0], [0], [1], [0, 0, 1, 1], [], []>} : vector<64x16xf32>, vector<16x32xf32>, vector<64x32xf32> -> vector<64x32xf32>
    %132 = arith.addf %129, %131 : vector<64x32xf32>
    %c0_47 = arith.constant 0 : index
    %c0_48 = arith.constant 0 : index
    %133 = vector.load %arg9[%c0_47, %c0_48] : memref<16x32xf32, #tpu.memory_space<vmem>>, vector<16x32xf32>
    %cst_49 = arith.constant dense<0.000000e+00> : vector<64x32xf32>
    %134 = tpu.matmul %127, %133, %cst_49 {dimension_numbers = #tpu.dot_dimension_numbers<[1], [0], [0], [1], [0, 0, 1, 1], [], []>} : vector<64x16xf32>, vector<16x32xf32>, vector<64x32xf32> -> vector<64x32xf32>
    %135 = arith.addf %132, %134 : vector<64x32xf32>
    %c0_50 = arith.constant 0 : index
    %c0_51 = arith.constant 0 : index
    %136 = vector.load %arg10[%c0_50, %c0_51] : memref<1x32xf32, #tpu.memory_space<vmem>>, vector<1x32xf32>
    %137 = vector.broadcast %136 : vector<1x32xf32> to vector<64x32xf32>
    %138 = arith.addf %135, %137 : vector<64x32xf32>
    %cst_52 = arith.constant 0.000000e+00 : f32
    %139 = vector.broadcast %cst_52 : f32 to vector<64x32xf32>
    %140 = arith.cmpf ogt, %138, %139 : vector<64x32xf32>
    %141 = math.exp %138 : vector<64x32xf32>
    %cst_53 = arith.constant 1.000000e+00 : f32
    %142 = vector.broadcast %cst_53 : f32 to vector<64x32xf32>
    %143 = arith.subf %141, %142 : vector<64x32xf32>
    %144 = arith.select %140, %138, %143 : vector<64x32xi1>, vector<64x32xf32>
    %c0_54 = arith.constant 0 : index
    %c0_55 = arith.constant 0 : index
    %145 = vector.load %arg11[%c0_54, %c0_55] : memref<32x8xf32, #tpu.memory_space<vmem>>, vector<32x8xf32>
    %cst_56 = arith.constant dense<0.000000e+00> : vector<64x8xf32>
    %146 = tpu.matmul %144, %145, %cst_56 {dimension_numbers = #tpu.dot_dimension_numbers<[1], [0], [0], [1], [0, 0, 1, 1], [], []>} : vector<64x32xf32>, vector<32x8xf32>, vector<64x8xf32> -> vector<64x8xf32>
    %c0_57 = arith.constant 0 : index
    %c0_58 = arith.constant 0 : index
    %147 = vector.load %arg12[%c0_57, %c0_58] : memref<1x8xf32, #tpu.memory_space<vmem>>, vector<1x8xf32>
    %148 = vector.broadcast %147 : vector<1x8xf32> to vector<64x8xf32>
    %149 = arith.addf %146, %148 : vector<64x8xf32>
    %c0_59 = arith.constant 0 : index
    %c0_60 = arith.constant 0 : index
    %c0_61 = arith.constant 0 : index
    %150 = vector.load %arg13[%c0_59, %c0_60, %c0_61] : memref<1x64x8xf32, #tpu.memory_space<vmem>>, vector<1x64x8xf32>
    %151 = vector.shape_cast %150 : vector<1x64x8xf32> to vector<64x8xf32>
    %152 = vector.shape_cast %149 : vector<64x8xf32> to vector<1x64x8xf32>
    tpu.vector_store %arg13[%c0_59, %c0_60, %c0_61], %152 {strides = array<i32>} : memref<1x64x8xf32, #tpu.memory_space<vmem>>, vector<1x64x8xf32>,
    return
  }
  func.func @transform_0(%arg0: i32) -> (i32, i32, i32) {
    %c0_i32 = arith.constant 0 : i32
    %c0_i32_0 = arith.constant 0 : i32
    %c0_i32_1 = arith.constant 0 : i32
    return %arg0, %c0_i32, %c0_i32_0 : i32, i32, i32
  }
  func.func @transform_1(%arg0: i32) -> (i32, i32, i32) {
    %c0_i32 = arith.constant 0 : i32
    %c0_i32_0 = arith.constant 0 : i32
    %c0_i32_1 = arith.constant 0 : i32
    return %arg0, %c0_i32, %c0_i32_0 : i32, i32, i32
  }
  func.func @transform_2(%arg0: i32) -> (i32, i32) {
    %c0_i32 = arith.constant 0 : i32
    %c0_i32_0 = arith.constant 0 : i32
    %c0_i32_1 = arith.constant 0 : i32
    return %c0_i32, %c0_i32_0 : i32, i32
  }
  func.func @transform_3(%arg0: i32) -> (i32, i32) {
    %c0_i32 = arith.constant 0 : i32
    %c0_i32_0 = arith.constant 0 : i32
    %c0_i32_1 = arith.constant 0 : i32
    return %c0_i32, %c0_i32_0 : i32, i32
  }
  func.func @transform_4(%arg0: i32) -> (i32, i32) {
    %c0_i32 = arith.constant 0 : i32
    %c0_i32_0 = arith.constant 0 : i32
    %c0_i32_1 = arith.constant 0 : i32
    return %c0_i32, %c0_i32_0 : i32, i32
  }
  func.func @transform_5(%arg0: i32) -> (i32, i32) {
    %c0_i32 = arith.constant 0 : i32
    %c0_i32_0 = arith.constant 0 : i32
    %c0_i32_1 = arith.constant 0 : i32
    return %c0_i32, %c0_i32_0 : i32, i32
  }
  func.func @transform_6(%arg0: i32) -> (i32, i32) {
    %c0_i32 = arith.constant 0 : i32
    %c0_i32_0 = arith.constant 0 : i32
    %c0_i32_1 = arith.constant 0 : i32
    return %c0_i32, %c0_i32_0 : i32, i32
  }
  func.func @transform_7(%arg0: i32) -> (i32, i32) {
    %c0_i32 = arith.constant 0 : i32
    %c0_i32_0 = arith.constant 0 : i32
    %c0_i32_1 = arith.constant 0 : i32
    return %c0_i32, %c0_i32_0 : i32, i32
  }
  func.func @transform_8(%arg0: i32) -> (i32, i32) {
    %c0_i32 = arith.constant 0 : i32
    %c0_i32_0 = arith.constant 0 : i32
    %c0_i32_1 = arith.constant 0 : i32
    return %c0_i32, %c0_i32_0 : i32, i32
  }
  func.func @transform_9(%arg0: i32) -> (i32, i32) {
    %c0_i32 = arith.constant 0 : i32
    %c0_i32_0 = arith.constant 0 : i32
    %c0_i32_1 = arith.constant 0 : i32
    return %c0_i32, %c0_i32_0 : i32, i32
  }
  func.func @transform_10(%arg0: i32) -> (i32, i32) {
    %c0_i32 = arith.constant 0 : i32
    %c0_i32_0 = arith.constant 0 : i32
    %c0_i32_1 = arith.constant 0 : i32
    return %c0_i32, %c0_i32_0 : i32, i32
  }
  func.func @transform_11(%arg0: i32) -> (i32, i32) {
    %c0_i32 = arith.constant 0 : i32
    %c0_i32_0 = arith.constant 0 : i32
    %c0_i32_1 = arith.constant 0 : i32
    return %c0_i32, %c0_i32_0 : i32, i32
  }
  func.func @transform_12(%arg0: i32) -> (i32, i32, i32) {
    %c0_i32 = arith.constant 0 : i32
    %c0_i32_0 = arith.constant 0 : i32
    %c0_i32_1 = arith.constant 0 : i32
    return %arg0, %c0_i32, %c0_i32_0 : i32, i32, i32
  }
}

</mosaic_0001>

<llo_original>
// kernel: tpu_custom_call.1
$region0: #{tpu_custom_call.1}
  #allocation0 [shape = 'u32[]', space=smem, size = 0x4, offset = 0x4, fixed_abs, tag = 'smem constant byte address 0x4 - core index']
  #allocation1 [shape = 'u32[144,128]{1,0:T(1,128)}', space=vmem, size = 0x12000, scoped, tag = 'internal scratch']
  %s0 = inlined_call_operand.vmem [shape: f32[2,64,16], index: 0, kind: input, shape index: {}]
  %s1 = inlined_call_operand.vmem [shape: f32[2,64,16], index: 1, kind: input, shape index: {}]
  %s2 = inlined_call_operand.vmem [shape: f32[16,32], index: 2, kind: input, shape index: {}]
  %s3 = inlined_call_operand.vmem [shape: f32[1,32], index: 3, kind: input, shape index: {}]
  %s4 = inlined_call_operand.vmem [shape: f32[32,20], index: 4, kind: input, shape index: {}]
  %s5 = inlined_call_operand.vmem [shape: f32[1,20], index: 5, kind: input, shape index: {}]
  %s6 = inlined_call_operand.vmem [shape: f32[32,32], index: 6, kind: input, shape index: {}]
  %s7 = inlined_call_operand.vmem [shape: f32[16,32], index: 7, kind: input, shape index: {}]
  %s8 = inlined_call_operand.vmem [shape: f32[16,32], index: 8, kind: input, shape index: {}]
  %s9 = inlined_call_operand.vmem [shape: f32[1,32], index: 9, kind: input, shape index: {}]
  %s10 = inlined_call_operand.vmem [shape: f32[32,8], index: 10, kind: input, shape index: {}]
  %s11 = inlined_call_operand.vmem [shape: f32[1,8], index: 11, kind: input, shape index: {}]
  %s12 = inlined_call_operand.vmem [shape: f32[2,64,8], index: 12, kind: output, shape index: {}]
  %s13 = sld [smem:[#allocation0]]
  $region81: #{tpu_custom_call.1} parent=0
    _
  %s15 = ssub.s32 1, %s13
  %s16 = scalar_select 0, %s15, %s13
  loop: start=0, step=1, limit=4
  $region2: #{tpu_custom_call.1} parent=0 // loop_pre_header
    _
  $region3: #{tpu_custom_call.1} parent=0 // loop_header
    %s18 = sphi 0, %s22
    %p19 = scmp.ge.s32.totalorder %s18, 4
    %s28 = sphi 0, %s30
    %s31 = sphi 0, %s28
    %s32 = sphi 0, %s31
    %s48 = sphi 0, %s32
    %s54 = sphi 0, %s56
    %s57 = sphi 0, %s54
    %s58 = sphi 0, %s57
    %s74 = sphi 0, %s58
    %s78 = sphi 0, %s78
    %s80 = sphi 0, %s78
    %s81 = sphi 0, %s80
    %s95 = sphi 0, %s81
    %s99 = sphi 0, %s99
    %s101 = sphi 0, %s99
    %s102 = sphi 0, %s101
    %s116 = sphi 0, %s102
    %s120 = sphi 0, %s120
    %s122 = sphi 0, %s120
    %s123 = sphi 0, %s122
    %s137 = sphi 0, %s123
    %s141 = sphi 0, %s141
    %s143 = sphi 0, %s141
    %s144 = sphi 0, %s143
    %s158 = sphi 0, %s144
    %s162 = sphi 0, %s162
    %s164 = sphi 0, %s162
    %s165 = sphi 0, %s164
    %s179 = sphi 0, %s165
    %s183 = sphi 0, %s183
    %s185 = sphi 0, %s183
    %s186 = sphi 0, %s185
    %s200 = sphi 0, %s186
    %s204 = sphi 0, %s204
    %s206 = sphi 0, %s204
    %s207 = sphi 0, %s206
    %s221 = sphi 0, %s207
    %s225 = sphi 0, %s225
    %s227 = sphi 0, %s225
    %s228 = sphi 0, %s227
    %s242 = sphi 0, %s228
    %s246 = sphi 0, %s246
    %s248 = sphi 0, %s246
    %s249 = sphi 0, %s248
    %s263 = sphi 0, %s249
    %s267 = sphi 0, %s267
    %s269 = sphi 0, %s267
    %s270 = sphi 0, %s269
    %s284 = sphi 0, %s270
    %s290 = sphi 0, %s292
    %s293 = sphi 0, %s290
    %s294 = sphi 0, %s293
    %s310 = sphi 0, %s294
  $region4: #{tpu_custom_call.1} parent=0 // loop_header_branch
    %21 = sbr.rel (%p19) target = $region8
  $region5: #{tpu_custom_call.1} parent=0 // loop_body
    %s23 = ssub.s32 %s18, 1
    %s24 = ssub.s32 %s18, 2
    %s25 = sadd.s32 %s18, 1
    %s26 = ssub.s32 %s18, %s25
    %p27 = scmp.eq.s32.totalorder %s26, 0
    %s29 = sadd.s32 %s28, 1
    %s30 = scalar_select %p27, %s28, %s29
    %p33 = pneg %p27
    %p34 = scmp.eq.s32.totalorder %s18, 1
    %p35 = por %p33, %p34
    %p36 = scmp.ne.s32.totalorder %s28, %s31
    %p37 = scmp.eq.s32.totalorder %s18, 0
    %p38 = por %p36, %p37
    %p39 = scmp.ne.s32.totalorder %s28, %s31
    %p40 = scmp.eq.s32.totalorder %s23, 1
    %p41 = por %p39, %p40
    %p42 = scmp.ne.s32.totalorder %s31, %s32
    %p43 = scmp.eq.s32.totalorder %s23, 0
    %p44 = por %p42, %p43
    %p45 = scmp.ne.s32.totalorder %s31, %s32
    %p46 = scmp.eq.s32.totalorder %s24, 1
    %p47 = por %p45, %p46
    %p49 = scmp.ne.s32.totalorder %s32, %s48
    %p50 = scmp.eq.s32.totalorder %s24, 0
    %p51 = por %p49, %p50
    %s52 = ssub.s32 %s18, %s25
    %p53 = scmp.eq.s32.totalorder %s52, 0
    %s55 = sadd.s32 %s54, 1
    %s56 = scalar_select %p53, %s54, %s55
    %p59 = pneg %p53
    %p60 = scmp.eq.s32.totalorder %s18, 1
    %p61 = por %p59, %p60
    %p62 = scmp.ne.s32.totalorder %s54, %s57
    %p63 = scmp.eq.s32.totalorder %s18, 0
    %p64 = por %p62, %p63
    %p65 = scmp.ne.s32.totalorder %s54, %s57
    %p66 = scmp.eq.s32.totalorder %s23, 1
    %p67 = por %p65, %p66
    %p68 = scmp.ne.s32.totalorder %s57, %s58
    %p69 = scmp.eq.s32.totalorder %s23, 0
    %p70 = por %p68, %p69
    %p71 = scmp.ne.s32.totalorder %s57, %s58
    %p72 = scmp.eq.s32.totalorder %s24, 1
    %p73 = por %p71, %p72
    %p75 = scmp.ne.s32.totalorder %s58, %s74
    %p76 = scmp.eq.s32.totalorder %s24, 0
    %p77 = por %p75, %p76
    %s79 = sadd.s32 %s78, 1
    %p82 = scmp.eq.s32.totalorder %s18, 1
    %p83 = scmp.ne.s32.totalorder %s78, %s80
    %p84 = scmp.eq.s32.totalorder %s18, 0
    %p85 = por %p83, %p84
    %p86 = scmp.ne.s32.totalorder %s78, %s80
    %p87 = scmp.eq.s32.totalorder %s23, 1
    %p88 = por %p86, %p87
    %p89 = scmp.ne.s32.totalorder %s80, %s81
    %p90 = scmp.eq.s32.totalorder %s23, 0
    %p91 = por %p89, %p90
    %p92 = scmp.ne.s32.totalorder %s80, %s81
    %p93 = scmp.eq.s32.totalorder %s24, 1
    %p94 = por %p92, %p93
    %p96 = scmp.ne.s32.totalorder %s81, %s95
    %p97 = scmp.eq.s32.totalorder %s24, 0
    %p98 = por %p96, %p97
    %s100 = sadd.s32 %s99, 1
    %p103 = scmp.eq.s32.totalorder %s18, 1
    %p104 = scmp.ne.s32.totalorder %s99, %s101
    %p105 = scmp.eq.s32.totalorder %s18, 0
    %p106 = por %p104, %p105
    %p107 = scmp.ne.s32.totalorder %s99, %s101
    %p108 = scmp.eq.s32.totalorder %s23, 1
    %p109 = por %p107, %p108
    %p110 = scmp.ne.s32.totalorder %s101, %s102
    %p111 = scmp.eq.s32.totalorder %s23, 0
    %p112 = por %p110, %p111
    %p113 = scmp.ne.s32.totalorder %s101, %s102
    %p114 = scmp.eq.s32.totalorder %s24, 1
    %p115 = por %p113, %p114
    %p117 = scmp.ne.s32.totalorder %s102, %s116
    %p118 = scmp.eq.s32.totalorder %s24, 0
    %p119 = por %p117, %p118
    %s121 = sadd.s32 %s120, 1
    %p124 = scmp.eq.s32.totalorder %s18, 1
    %p125 = scmp.ne.s32.totalorder %s120, %s122
    %p126 = scmp.eq.s32.totalorder %s18, 0
    %p127 = por %p125, %p126
    %p128 = scmp.ne.s32.totalorder %s120, %s122
    %p129 = scmp.eq.s32.totalorder %s23, 1
    %p130 = por %p128, %p129
    %p131 = scmp.ne.s32.totalorder %s122, %s123
    %p132 = scmp.eq.s32.totalorder %s23, 0
    %p133 = por %p131, %p132
    %p134 = scmp.ne.s32.totalorder %s122, %s123
    %p135 = scmp.eq.s32.totalorder %s24, 1
    %p136 = por %p134, %p135
    %p138 = scmp.ne.s32.totalorder %s123, %s137
    %p139 = scmp.eq.s32.totalorder %s24, 0
    %p140 = por %p138, %p139
    %s142 = sadd.s32 %s141, 1
    %p145 = scmp.eq.s32.totalorder %s18, 1
    %p146 = scmp.ne.s32.totalorder %s141, %s143
    %p147 = scmp.eq.s32.totalorder %s18, 0
    %p148 = por %p146, %p147
    %p149 = scmp.ne.s32.totalorder %s141, %s143
    %p150 = scmp.eq.s32.totalorder %s23, 1
    %p151 = por %p149, %p150
    %p152 = scmp.ne.s32.totalorder %s143, %s144
    %p153 = scmp.eq.s32.totalorder %s23, 0
    %p154 = por %p152, %p153
    %p155 = scmp.ne.s32.totalorder %s143, %s144
    %p156 = scmp.eq.s32.totalorder %s24, 1
    %p157 = por %p155, %p156
    %p159 = scmp.ne.s32.totalorder %s144, %s158
    %p160 = scmp.eq.s32.totalorder %s24, 0
    %p161 = por %p159, %p160
    %s163 = sadd.s32 %s162, 1
    %p166 = scmp.eq.s32.totalorder %s18, 1
    %p167 = scmp.ne.s32.totalorder %s162, %s164
    %p168 = scmp.eq.s32.totalorder %s18, 0
    %p169 = por %p167, %p168
    %p170 = scmp.ne.s32.totalorder %s162, %s164
    %p171 = scmp.eq.s32.totalorder %s23, 1
    %p172 = por %p170, %p171
    %p173 = scmp.ne.s32.totalorder %s164, %s165
    %p174 = scmp.eq.s32.totalorder %s23, 0
    %p175 = por %p173, %p174
    %p176 = scmp.ne.s32.totalorder %s164, %s165
    %p177 = scmp.eq.s32.totalorder %s24, 1
    %p178 = por %p176, %p177
    %p180 = scmp.ne.s32.totalorder %s165, %s179
    %p181 = scmp.eq.s32.totalorder %s24, 0
    %p182 = por %p180, %p181
    %s184 = sadd.s32 %s183, 1
    %p187 = scmp.eq.s32.totalorder %s18, 1
    %p188 = scmp.ne.s32.totalorder %s183, %s185
    %p189 = scmp.eq.s32.totalorder %s18, 0
    %p190 = por %p188, %p189
    %p191 = scmp.ne.s32.totalorder %s183, %s185
    %p192 = scmp.eq.s32.totalorder %s23, 1
    %p193 = por %p191, %p192
    %p194 = scmp.ne.s32.totalorder %s185, %s186
    %p195 = scmp.eq.s32.totalorder %s23, 0
    %p196 = por %p194, %p195
    %p197 = scmp.ne.s32.totalorder %s185, %s186
    %p198 = scmp.eq.s32.totalorder %s24, 1
    %p199 = por %p197, %p198
    %p201 = scmp.ne.s32.totalorder %s186, %s200
    %p202 = scmp.eq.s32.totalorder %s24, 0
    %p203 = por %p201, %p202
    %s205 = sadd.s32 %s204, 1
    %p208 = scmp.eq.s32.totalorder %s18, 1
    %p209 = scmp.ne.s32.totalorder %s204, %s206
    %p210 = scmp.eq.s32.totalorder %s18, 0
    %p211 = por %p209, %p210
    %p212 = scmp.ne.s32.totalorder %s204, %s206
    %p213 = scmp.eq.s32.totalorder %s23, 1
    %p214 = por %p212, %p213
    %p215 = scmp.ne.s32.totalorder %s206, %s207
    %p216 = scmp.eq.s32.totalorder %s23, 0
    %p217 = por %p215, %p216
    %p218 = scmp.ne.s32.totalorder %s206, %s207
    %p219 = scmp.eq.s32.totalorder %s24, 1
    %p220 = por %p218, %p219
    %p222 = scmp.ne.s32.totalorder %s207, %s221
    %p223 = scmp.eq.s32.totalorder %s24, 0
    %p224 = por %p222, %p223
    %s226 = sadd.s32 %s225, 1
    %p229 = scmp.eq.s32.totalorder %s18, 1
    %p230 = scmp.ne.s32.totalorder %s225, %s227
    %p231 = scmp.eq.s32.totalorder %s18, 0
    %p232 = por %p230, %p231
    %p233 = scmp.ne.s32.totalorder %s225, %s227
    %p234 = scmp.eq.s32.totalorder %s23, 1
    %p235 = por %p233, %p234
    %p236 = scmp.ne.s32.totalorder %s227, %s228
    %p237 = scmp.eq.s32.totalorder %s23, 0
    %p238 = por %p236, %p237
    %p239 = scmp.ne.s32.totalorder %s227, %s228
    %p240 = scmp.eq.s32.totalorder %s24, 1
    %p241 = por %p239, %p240
    %p243 = scmp.ne.s32.totalorder %s228, %s242
    %p244 = scmp.eq.s32.totalorder %s24, 0
    %p245 = por %p243, %p244
    %s247 = sadd.s32 %s246, 1
    %p250 = scmp.eq.s32.totalorder %s18, 1
    %p251 = scmp.ne.s32.totalorder %s246, %s248
    %p252 = scmp.eq.s32.totalorder %s18, 0
    %p253 = por %p251, %p252
    %p254 = scmp.ne.s32.totalorder %s246, %s248
    %p255 = scmp.eq.s32.totalorder %s23, 1
    %p256 = por %p254, %p255
    %p257 = scmp.ne.s32.totalorder %s248, %s249
    %p258 = scmp.eq.s32.totalorder %s23, 0
    %p259 = por %p257, %p258
    %p260 = scmp.ne.s32.totalorder %s248, %s249
    %p261 = scmp.eq.s32.totalorder %s24, 1
    %p262 = por %p260, %p261
    %p264 = scmp.ne.s32.totalorder %s249, %s263
    %p265 = scmp.eq.s32.totalorder %s24, 0
    %p266 = por %p264, %p265
    %s268 = sadd.s32 %s267, 1
    %p271 = scmp.eq.s32.totalorder %s18, 1
    %p272 = scmp.ne.s32.totalorder %s267, %s269
    %p273 = scmp.eq.s32.totalorder %s18, 0
    %p274 = por %p272, %p273
    %p275 = scmp.ne.s32.totalorder %s267, %s269
    %p276 = scmp.eq.s32.totalorder %s23, 1
    %p277 = por %p275, %p276
    %p278 = scmp.ne.s32.totalorder %s269, %s270
    %p279 = scmp.eq.s32.totalorder %s23, 0
    %p280 = por %p278, %p279
    %p281 = scmp.ne.s32.totalorder %s269, %s270
    %p282 = scmp.eq.s32.totalorder %s24, 1
    %p283 = por %p281, %p282
    %p285 = scmp.ne.s32.totalorder %s270, %s284
    %p286 = scmp.eq.s32.totalorder %s24, 0
    %p287 = por %p285, %p286
    %s288 = ssub.s32 %s18, %s25
    %p289 = scmp.eq.s32.totalorder %s288, 0
    %s291 = sadd.s32 %s290, 1
    %s292 = scalar_select %p289, %s290, %s291
    %p295 = pneg %p289
    %p296 = scmp.eq.s32.totalorder %s18, 1
    %p297 = por %p295, %p296
    %p298 = scmp.ne.s32.totalorder %s290, %s293
    %p299 = scmp.eq.s32.totalorder %s18, 0
    %p300 = por %p298, %p299
    %p301 = scmp.ne.s32.totalorder %s290, %s293
    %p302 = scmp.eq.s32.totalorder %s23, 1
    %p303 = por %p301, %p302
    %p304 = scmp.ne.s32.totalorder %s293, %s294
    %p305 = scmp.eq.s32.totalorder %s23, 0
    %p306 = por %p304, %p305
    %p307 = scmp.ne.s32.totalorder %s293, %s294
    %p308 = scmp.eq.s32.totalorder %s24, 1
    %p309 = por %p307, %p308
    %p311 = scmp.ne.s32.totalorder %s294, %s310
    %p312 = scmp.eq.s32.totalorder %s24, 0
    %p313 = por %p311, %p312
    %p314 = scmp.le.s32.totalorder 1, %s18
    %p315 = scmp.lt.s32.totalorder %s18, 3
    %p316 = pnand %p314, %p315
    %p317 = pneg %p316
    // Predicated region
    $region9: #{tpu_custom_call.1} parent=5 // pred_check
      _
    $region10: #{tpu_custom_call.1} parent=5 // pred_check_branch
      %319 = sbr.rel (%p316) target = $region12
    $region11: #{tpu_custom_call.1} parent=5 // pred_region
      %s320 = ssub.s32 %s18, 1
      // Predicated region
      $region13: #{tpu_custom_call.1} parent=11 // pred_check
        %p321 = pneg %p91
      $region14: #{tpu_custom_call.1} parent=11 // pred_check_branch
        %323 = sbr.rel (%p321) target = $region16
      $region15: #{tpu_custom_call.1} parent=11 // pred_region
        _
      $region16: #{tpu_custom_call.1} parent=11 // pred_fallthru
        _
      // Predicated region
      $region17: #{tpu_custom_call.1} parent=11 // pred_check
        %p324 = pneg %p112
      $region18: #{tpu_custom_call.1} parent=11 // pred_check_branch
        %326 = sbr.rel (%p324) target = $region20
      $region19: #{tpu_custom_call.1} parent=11 // pred_region
        _
      $region20: #{tpu_custom_call.1} parent=11 // pred_fallthru
        _
      // Predicated region
      $region21: #{tpu_custom_call.1} parent=11 // pred_check
        %p327 = pneg %p133
      $region22: #{tpu_custom_call.1} parent=11 // pred_check_branch
        %329 = sbr.rel (%p327) target = $region24
      $region23: #{tpu_custom_call.1} parent=11 // pred_region
        _
      $region24: #{tpu_custom_call.1} parent=11 // pred_fallthru
        _
      // Predicated region
      $region25: #{tpu_custom_call.1} parent=11 // pred_check
        %p330 = pneg %p154
      $region26: #{tpu_custom_call.1} parent=11 // pred_check_branch
        %332 = sbr.rel (%p330) target = $region28
      $region27: #{tpu_custom_call.1} parent=11 // pred_region
        _
      $region28: #{tpu_custom_call.1} parent=11 // pred_fallthru
        _
      // Predicated region
      $region29: #{tpu_custom_call.1} parent=11 // pred_check
        %p333 = pneg %p175
      $region30: #{tpu_custom_call.1} parent=11 // pred_check_branch
        %335 = sbr.rel (%p333) target = $region32
      $region31: #{tpu_custom_call.1} parent=11 // pred_region
        _
      $region32: #{tpu_custom_call.1} parent=11 // pred_fallthru
        _
      // Predicated region
      $region33: #{tpu_custom_call.1} parent=11 // pred_check
        %p336 = pneg %p196
      $region34: #{tpu_custom_call.1} parent=11 // pred_check_branch
        %338 = sbr.rel (%p336) target = $region36
      $region35: #{tpu_custom_call.1} parent=11 // pred_region
        _
      $region36: #{tpu_custom_call.1} parent=11 // pred_fallthru
        _
      // Predicated region
      $region37: #{tpu_custom_call.1} parent=11 // pred_check
        %p339 = pneg %p217
      $region38: #{tpu_custom_call.1} parent=11 // pred_check_branch
        %341 = sbr.rel (%p339) target = $region40
      $region39: #{tpu_custom_call.1} parent=11 // pred_region
        _
      $region40: #{tpu_custom_call.1} parent=11 // pred_fallthru
        _
      // Predicated region
      $region41: #{tpu_custom_call.1} parent=11 // pred_check
        %p342 = pneg %p238
      $region42: #{tpu_custom_call.1} parent=11 // pred_check_branch
        %344 = sbr.rel (%p342) target = $region44
      $region43: #{tpu_custom_call.1} parent=11 // pred_region
        _
      $region44: #{tpu_custom_call.1} parent=11 // pred_fallthru
        _
      // Predicated region
      $region45: #{tpu_custom_call.1} parent=11 // pred_check
        %p345 = pneg %p259
      $region46: #{tpu_custom_call.1} parent=11 // pred_check_branch
        %347 = sbr.rel (%p345) target = $region48
      $region47: #{tpu_custom_call.1} parent=11 // pred_region
        _
      $region48: #{tpu_custom_call.1} parent=11 // pred_fallthru
        _
      // Predicated region
      $region49: #{tpu_custom_call.1} parent=11 // pred_check
        %p348 = pneg %p280
      $region50: #{tpu_custom_call.1} parent=11 // pred_check_branch
        %350 = sbr.rel (%p348) target = $region52
      $region51: #{tpu_custom_call.1} parent=11 // pred_region
        _
      $region52: #{tpu_custom_call.1} parent=11 // pred_fallthru
        _
    $region12: #{tpu_custom_call.1} parent=5 // pred_fallthru
      _
    %p351 = scmp.lt.s32.totalorder %s18, 2
    // Predicated region
    $region53: #{tpu_custom_call.1} parent=5 // pred_check
      %p352 = pneg %p351
    $region54: #{tpu_custom_call.1} parent=5 // pred_check_branch
      %354 = sbr.rel (%p352) target = $region56
    $region55: #{tpu_custom_call.1} parent=5 // pred_region
      // Predicated region
      $region57: #{tpu_custom_call.1} parent=55 // pred_check
        %p355 = pneg %p38
      $region58: #{tpu_custom_call.1} parent=55 // pred_check_branch
        %357 = sbr.rel (%p355) target = $region60
      $region59: #{tpu_custom_call.1} parent=55 // pred_region
        %p358 = scmp.lt.s32.totalorder %s18, 1
        %s359 = scalar_select %p358, %s18, 1
        %s360 = smul.addr %s359, 8
        %s361 = smul.addr %s360, 8
        %s362 = scalar_lea.vmem %s0, %s361
      $region60: #{tpu_custom_call.1} parent=55 // pred_fallthru
        _
      // Predicated region
      $region61: #{tpu_custom_call.1} parent=55 // pred_check
        %p363 = pneg %p64
      $region62: #{tpu_custom_call.1} parent=55 // pred_check_branch
        %365 = sbr.rel (%p363) target = $region64
      $region63: #{tpu_custom_call.1} parent=55 // pred_region
        %p366 = scmp.lt.s32.totalorder %s18, 1
        %s367 = scalar_select %p366, %s18, 1
        %s368 = smul.addr %s367, 8
        %s369 = smul.addr %s368, 8
        %s370 = scalar_lea.vmem %s1, %s369
      $region64: #{tpu_custom_call.1} parent=55 // pred_fallthru
        _
    $region56: #{tpu_custom_call.1} parent=5 // pred_fallthru
      _
    %p371 = scmp.le.s32.totalorder 1, %s18
    %p372 = scmp.lt.s32.totalorder %s18, 3
    %p373 = pnand %p371, %p372
    %p374 = pneg %p373
    // Predicated region
    $region65: #{tpu_custom_call.1} parent=5 // pred_check
      _
    $region66: #{tpu_custom_call.1} parent=5 // pred_check_branch
      %376 = sbr.rel (%p373) target = $region68
    $region67: #{tpu_custom_call.1} parent=5 // pred_region
      %s377 = ssub.s32 %s18, 1
      %p378 = scmp.lt.s32.totalorder %s23, 1
      %s379 = scalar_select %p378, %s23, 1
      %s380 = smul.addr %s379, 8
      %s381 = smul.addr %s380, 8
      %s382 = scalar_lea.vmem %s0, %s381
      %p383 = pneg %p44
      %p384 = pneg %p41
      %p385 = scmp.lt.s32.totalorder %s23, 1
      %s386 = scalar_select %p385, %s23, 1
      %s387 = smul.addr %s386, 8
      %s388 = smul.addr %s387, 8
      %s389 = scalar_lea.vmem %s1, %s388
      %p390 = pneg %p70
      %p391 = pneg %p67
      %p392 = pneg %p91
      %p393 = pneg %p88
      %p394 = pneg %p112
      %p395 = pneg %p109
      %p396 = pneg %p133
      %p397 = pneg %p130
      %p398 = pneg %p154
      %p399 = pneg %p151
      %p400 = pneg %p175
      %p401 = pneg %p172
      %p402 = pneg %p196
      %p403 = pneg %p193
      %p404 = pneg %p217
      %p405 = pneg %p214
      %p406 = pneg %p238
      %p407 = pneg %p235
      %p408 = pneg %p259
      %p409 = pneg %p256
      %p410 = pneg %p280
      %p411 = pneg %p277
      %p412 = pneg %p306
      %p413 = pneg %p303
      %p414 = scmp.lt.s32.totalorder %s23, 1
      %s415 = scalar_select %p414, %s23, 1
      %s416 = smul.addr %s415, 8
      %s417 = smul.addr %s416, 8
      %s418 = scalar_lea.vmem %s12, %s417
      %p419 = scmp.lt.s32.totalorder %s23, 1
      %s420 = scalar_select %p419, %s23, 1
      %s421 = smul.addr %s420, 8
      %s422 = smul.addr %s421, 8
      %s423 = scalar_lea.vmem %s0, %s422
      %p424 = scmp.lt.s32.totalorder %s23, 1
      %s425 = scalar_select %p424, %s23, 1
      %s426 = smul.addr %s425, 8
      %s427 = smul.addr %s426, 8
      %s428 = scalar_lea.vmem %s1, %s427
      %p429 = scmp.lt.s32.totalorder %s23, 1
      %s430 = scalar_select %p429, %s23, 1
      %s431 = smul.addr %s430, 8
      %s432 = smul.addr %s431, 8
      %s433 = scalar_lea.vmem %s12, %s432
      %v434 = vld [vmem:[%s423] sm:$0xff]
      %v435 = vld [vmem:[%s423 + $0x8] sm:$0xff]
      %v436 = vld [vmem:[%s423 + $0x10] sm:$0xff]
      %v437 = vld [vmem:[%s423 + $0x18] sm:$0xff]
      %v438 = vld [vmem:[%s423 + $0x20] sm:$0xff]
      %v439 = vld [vmem:[%s423 + $0x28] sm:$0xff]
      %v440 = vld [vmem:[%s423 + $0x30] sm:$0xff]
      %v441 = vld [vmem:[%s423 + $0x38] sm:$0xff]
      %v442 = vld [vmem:[%s428] sm:$0xff]
      %v443 = vld [vmem:[%s428 + $0x8] sm:$0xff]
      %v444 = vld [vmem:[%s428 + $0x10] sm:$0xff]
      %v445 = vld [vmem:[%s428 + $0x18] sm:$0xff]
      %v446 = vld [vmem:[%s428 + $0x20] sm:$0xff]
      %v447 = vld [vmem:[%s428 + $0x28] sm:$0xff]
      %v448 = vld [vmem:[%s428 + $0x30] sm:$0xff]
      %v449 = vld [vmem:[%s428 + $0x38] sm:$0xff]
      %v450 = vadd.f32 %v434, %v442
      %v451 = vadd.f32 %v435, %v443
      %v452 = vadd.f32 %v436, %v444
      %v453 = vadd.f32 %v437, %v445
      %v454 = vadd.f32 %v438, %v446
      %v455 = vadd.f32 %v439, %v447
      %v456 = vadd.f32 %v440, %v448
      %v457 = vadd.f32 %v441, %v449
      %v458 = vld [vmem:[%s2] sm:$0xff]
      %v459 = vld [vmem:[%s2 + $0x8] sm:$0xff]
      %v460 = vld [vmem:[%s3] sm:$0x1]
      %v462 = vlaneseq
      %v463 = vshrl.u32 %v462, 7
      %v464 = vsub.s32 0, %v463
      %v465 = vrot.slane %v460, %v464
      %vm467 = vcmask 130048
      %v469 = vsel %vm467, %v450, 0
      %v472 = vsel %vm467, %v451, 0
      %v475 = vsel %vm467, %v452, 0
      %v478 = vsel %vm467, %v453, 0
      %v481 = vsel %vm467, %v454, 0
      %v484 = vsel %vm467, %v455, 0
      %v487 = vsel %vm467, %v456, 0
      %v490 = vsel %vm467, %v457, 0
      %492 = vmatprep.subr.mxu0 0.0
      %493 = vmatpush1.msra.mxu0 %v458
      %494 = vmatprep.subr.mxu0 0.0
      %495 = vmatpush1.msra.mxu0 %v459
      %496 = vmatprep.subr.mxu0 0.0
      %497 = vmatpush1.msra.mxu0 0.0
      %498 = vmatprep.subr.mxu0 0.0
      %499 = vmatpush1.msra.mxu0 0.0
      %500 = vmatprep.subr.mxu0 0.0
      %501 = vmatpush1.msra.mxu0 0.0
      %502 = vmatprep.subr.mxu0 0.0
      %503 = vmatpush1.msra.mxu0 0.0
      %504 = vmatprep.subr.mxu0 0.0
      %505 = vmatpush1.msra.mxu0 0.0
      %506 = vmatprep.subr.mxu0 0.0
      %507 = vmatpush1.msra.mxu0 0.0
      %508 = vmatprep.subr.mxu0 0.0
      %509 = vmatpush1.msra.mxu0 0.0
      %510 = vmatprep.subr.mxu0 0.0
      %511 = vmatpush1.msra.mxu0 0.0
      %512 = vmatprep.subr.mxu0 0.0
      %513 = vmatpush1.msra.mxu0 0.0
      %514 = vmatprep.subr.mxu0 0.0
      %515 = vmatpush1.msra.mxu0 0.0
      %516 = vmatprep.subr.mxu0 0.0
      %517 = vmatpush1.msra.mxu0 0.0
      %518 = vmatprep.subr.mxu0 0.0
      %519 = vmatpush1.msra.mxu0 0.0
      %520 = vmatprep.subr.mxu0 0.0
      %521 = vmatpush1.msra.mxu0 0.0
      %522 = vmatprep.subr.mxu0 0.0
      %523 = vmatpush1.msra.mxu0 0.0
      %524 = vmatprep.subr.mxu0 0.0
      %525 = vmatpush1.msra.mxu0 0.0
      %526 = vmatprep.subr.mxu0 0.0
      %527 = vmatpush1.msra.mxu0 0.0
      %528 = vmatprep.subr.mxu0 0.0
      %529 = vmatpush1.msra.mxu0 0.0
      %530 = vmatprep.subr.mxu0 0.0
      %531 = vmatpush1.msra.mxu0 0.0
      %532 = vmatprep.subr.mxu0 0.0
      %533 = vmatpush1.msra.mxu0 0.0
      %534 = vmatprep.subr.mxu0 0.0
      %535 = vmatpush1.msra.mxu0 0.0
      %536 = vmatprep.subr.mxu0 0.0
      %537 = vmatpush1.msra.mxu0 0.0
      %538 = vmatprep.subr.mxu0 0.0
      %539 = vmatpush1.msra.mxu0 0.0
      %540 = vmatprep.subr.mxu0 0.0
      %541 = vmatpush1.msra.mxu0 0.0
      %542 = vmatprep.subr.mxu0 0.0
      %543 = vmatpush1.msra.mxu0 0.0
      %544 = vmatprep.subr.mxu0 0.0
      %545 = vmatpush1.msra.mxu0 0.0
      %546 = vmatprep.subr.mxu0 0.0
      %547 = vmatpush1.msra.mxu0 0.0
      %548 = vmatprep.subr.mxu0 0.0
      %549 = vmatpush1.msra.mxu0 0.0
      %550 = vmatprep.subr.mxu0 0.0
      %551 = vmatpush1.msra.mxu0 0.0
      %552 = vmatprep.subr.mxu0 0.0
      %553 = vmatpush1.msra.mxu0 0.0
      %554 = vmatprep.subr.mxu0 0.0
      %555 = vmatpush1.msra.mxu0 0.0
      %556 = vmatprep.mubr.f32.mxu0 0.0
      %557 = vmatmul.mubr.f32.gmra.mrb[0].mxu0 %v469
      %v558 = vpop.f32.mrb[0].mxu0
      %v559 = vadd.f32 %v465, %v558
      %v560 = vpop.f32.mrb[0].mxu0
      %561 = vmatprep.mubr.f32.mxu0 0.0
      %562 = vmatmul.mubr.f32.gmra.mrb[0].mxu0 %v472
      %v563 = vpop.f32.mrb[0].mxu0
      %v564 = vadd.f32 %v465, %v563
      %v565 = vpop.f32.mrb[0].mxu0
      %566 = vmatprep.mubr.f32.mxu0 0.0
      %567 = vmatmul.mubr.f32.gmra.mrb[0].mxu0 %v475
      %v568 = vpop.f32.mrb[0].mxu0
      %v569 = vadd.f32 %v465, %v568
      %v570 = vpop.f32.mrb[0].mxu0
      %571 = vmatprep.mubr.f32.mxu0 0.0
      %572 = vmatmul.mubr.f32.gmra.mrb[0].mxu0 %v478
      %v573 = vpop.f32.mrb[0].mxu0
      %v574 = vadd.f32 %v465, %v573
      %v575 = vpop.f32.mrb[0].mxu0
      %576 = vmatprep.mubr.f32.mxu0 0.0
      %577 = vmatmul.mubr.f32.gmra.mrb[0].mxu0 %v481
      %v578 = vpop.f32.mrb[0].mxu0
      %v579 = vadd.f32 %v465, %v578
      %v580 = vpop.f32.mrb[0].mxu0
      %581 = vmatprep.mubr.f32.mxu0 0.0
      %582 = vmatmul.mubr.f32.gmra.mrb[0].mxu0 %v484
      %v583 = vpop.f32.mrb[0].mxu0
      %v584 = vadd.f32 %v465, %v583
      %v585 = vpop.f32.mrb[0].mxu0
      %586 = vmatprep.mubr.f32.mxu0 0.0
      %587 = vmatmul.mubr.f32.gmra.mrb[0].mxu0 %v487
      %v588 = vpop.f32.mrb[0].mxu0
      %v589 = vadd.f32 %v465, %v588
      %v590 = vpop.f32.mrb[0].mxu0
      %591 = vmatprep.mubr.f32.mxu0 0.0
      %592 = vmatmul.mubr.f32.gmra.mrb[0].mxu0 %v490
      %v593 = vpop.f32.mrb[0].mxu0
      %v594 = vadd.f32 %v465, %v593
      %v595 = vpop.f32.mrb[0].mxu0
      %596 = vdwg.mxu0
      %vm597 = vcmp.gt.f32.partialorder %v559, 0.0
      %vm598 = vcmp.gt.f32.partialorder %v564, 0.0
      %vm599 = vcmp.gt.f32.partialorder %v569, 0.0
      %vm600 = vcmp.gt.f32.partialorder %v574, 0.0
      %vm601 = vcmp.gt.f32.partialorder %v579, 0.0
      %vm602 = vcmp.gt.f32.partialorder %v584, 0.0
      %vm603 = vcmp.gt.f32.partialorder %v589, 0.0
      %vm604 = vcmp.gt.f32.partialorder %v594, 0.0
      %v605 = vmul.f32 %v559, 1.442695
      %v606 = vpow.pop %v605
      %v607 = vmul.f32 %v564, 1.442695
      %v608 = vpow.pop %v607
      %v609 = vmul.f32 %v569, 1.442695
      %v610 = vpow.pop %v609
      %v611 = vmul.f32 %v574, 1.442695
      %v612 = vpow.pop %v611
      %v613 = vmul.f32 %v579, 1.442695
      %v614 = vpow.pop %v613
      %v615 = vmul.f32 %v584, 1.442695
      %v616 = vpow.pop %v615
      %v617 = vmul.f32 %v589, 1.442695
      %v618 = vpow.pop %v617
      %v619 = vmul.f32 %v594, 1.442695
      %v620 = vpow.pop %v619
      %v621 = vsub.f32 %v606, 1.0
      %v622 = vsub.f32 %v608, 1.0
      %v623 = vsub.f32 %v610, 1.0
      %v624 = vsub.f32 %v612, 1.0
      %v625 = vsub.f32 %v614, 1.0
      %v626 = vsub.f32 %v616, 1.0
      %v627 = vsub.f32 %v618, 1.0
      %v628 = vsub.f32 %v620, 1.0
      %v629 = vsel %vm597, %v559, %v621
      %v630 = vsel %vm598, %v564, %v622
      %v631 = vsel %vm599, %v569, %v623
      %v632 = vsel %vm600, %v574, %v624
      %v633 = vsel %vm601, %v579, %v625
      %v634 = vsel %vm602, %v584, %v626
      %v635 = vsel %vm603, %v589, %v627
      %v636 = vsel %vm604, %v594, %v628
      %v637 = vld [vmem:[%s4] sm:$0xff]
      %v638 = vld [vmem:[%s4 + $0x8] sm:$0xff]
      %v639 = vld [vmem:[%s4 + $0x10] sm:$0xff]
      %v640 = vld [vmem:[%s4 + $0x18] sm:$0xff]
      %v641 = vld [vmem:[%s5] sm:$0x1]
      %v643 = vlaneseq
      %v644 = vshrl.u32 %v643, 7
      %v645 = vsub.s32 0, %v644
      %v646 = vrot.slane %v641, %v645
      %vm648 = vcmask 261120
      %v650 = vsel %vm648, %v629, 0
      %v653 = vsel %vm648, %v630, 0
      %v656 = vsel %vm648, %v631, 0
      %v659 = vsel %vm648, %v632, 0
      %v662 = vsel %vm648, %v633, 0
      %v665 = vsel %vm648, %v634, 0
      %v668 = vsel %vm648, %v635, 0
      %v671 = vsel %vm648, %v636, 0
      %673 = vmatprep.subr.mxu0 0.0
      %674 = vmatpush1.msra.mxu0 %v637
      %675 = vmatprep.subr.mxu0 0.0
      %676 = vmatpush1.msra.mxu0 %v638
      %677 = vmatprep.subr.mxu0 0.0
      %678 = vmatpush1.msra.mxu0 %v639
      %679 = vmatprep.subr.mxu0 0.0
      %680 = vmatpush1.msra.mxu0 %v640
      %681 = vmatprep.subr.mxu0 0.0
      %682 = vmatpush1.msra.mxu0 0.0
      %683 = vmatprep.subr.mxu0 0.0
      %684 = vmatpush1.msra.mxu0 0.0
      %685 = vmatprep.subr.mxu0 0.0
      %686 = vmatpush1.msra.mxu0 0.0
      %687 = vmatprep.subr.mxu0 0.0
      %688 = vmatpush1.msra.mxu0 0.0
      %689 = vmatprep.subr.mxu0 0.0
      %690 = vmatpush1.msra.mxu0 0.0
      %691 = vmatprep.subr.mxu0 0.0
      %692 = vmatpush1.msra.mxu0 0.0
      %693 = vmatprep.subr.mxu0 0.0
      %694 = vmatpush1.msra.mxu0 0.0
      %695 = vmatprep.subr.mxu0 0.0
      %696 = vmatpush1.msra.mxu0 0.0
      %697 = vmatprep.subr.mxu0 0.0
      %698 = vmatpush1.msra.mxu0 0.0
      %699 = vmatprep.subr.mxu0 0.0
      %700 = vmatpush1.msra.mxu0 0.0
      %701 = vmatprep.subr.mxu0 0.0
      %702 = vmatpush1.msra.mxu0 0.0
      %703 = vmatprep.subr.mxu0 0.0
      %704 = vmatpush1.msra.mxu0 0.0
      %705 = vmatprep.subr.mxu0 0.0
      %706 = vmatpush1.msra.mxu0 0.0
      %707 = vmatprep.subr.mxu0 0.0
      %708 = vmatpush1.msra.mxu0 0.0
      %709 = vmatprep.subr.mxu0 0.0
      %710 = vmatpush1.msra.mxu0 0.0
      %711 = vmatprep.subr.mxu0 0.0
      %712 = vmatpush1.msra.mxu0 0.0
      %713 = vmatprep.subr.mxu0 0.0
      %714 = vmatpush1.msra.mxu0 0.0
      %715 = vmatprep.subr.mxu0 0.0
      %716 = vmatpush1.msra.mxu0 0.0
      %717 = vmatprep.subr.mxu0 0.0
      %718 = vmatpush1.msra.mxu0 0.0
      %719 = vmatprep.subr.mxu0 0.0
      %720 = vmatpush1.msra.mxu0 0.0
      %721 = vmatprep.subr.mxu0 0.0
      %722 = vmatpush1.msra.mxu0 0.0
      %723 = vmatprep.subr.mxu0 0.0
      %724 = vmatpush1.msra.mxu0 0.0
      %725 = vmatprep.subr.mxu0 0.0
      %726 = vmatpush1.msra.mxu0 0.0
      %727 = vmatprep.subr.mxu0 0.0
      %728 = vmatpush1.msra.mxu0 0.0
      %729 = vmatprep.subr.mxu0 0.0
      %730 = vmatpush1.msra.mxu0 0.0
      %731 = vmatprep.subr.mxu0 0.0
      %732 = vmatpush1.msra.mxu0 0.0
      %733 = vmatprep.subr.mxu0 0.0
      %734 = vmatpush1.msra.mxu0 0.0
      %735 = vmatprep.subr.mxu0 0.0
      %736 = vmatpush1.msra.mxu0 0.0
      %737 = vmatprep.mubr.f32.mxu0 0.0
      %738 = vmatmul.mubr.f32.gmra.mrb[0].mxu0 %v650
      %v739 = vpop.f32.mrb[0].mxu0
      %v740 = vadd.f32 %v646, %v739
      %v741 = vpop.f32.mrb[0].mxu0
      %742 = vmatprep.mubr.f32.mxu0 0.0
      %743 = vmatmul.mubr.f32.gmra.mrb[0].mxu0 %v653
      %v744 = vpop.f32.mrb[0].mxu0
      %v745 = vadd.f32 %v646, %v744
      %v746 = vpop.f32.mrb[0].mxu0
      %747 = vmatprep.mubr.f32.mxu0 0.0
      %748 = vmatmul.mubr.f32.gmra.mrb[0].mxu0 %v656
      %v749 = vpop.f32.mrb[0].mxu0
      %v750 = vadd.f32 %v646, %v749
      %v751 = vpop.f32.mrb[0].mxu0
      %752 = vmatprep.mubr.f32.mxu0 0.0
      %753 = vmatmul.mubr.f32.gmra.mrb[0].mxu0 %v659
      %v754 = vpop.f32.mrb[0].mxu0
      %v755 = vadd.f32 %v646, %v754
      %v756 = vpop.f32.mrb[0].mxu0
      %757 = vmatprep.mubr.f32.mxu0 0.0
      %758 = vmatmul.mubr.f32.gmra.mrb[0].mxu0 %v662
      %v759 = vpop.f32.mrb[0].mxu0
      %v760 = vadd.f32 %v646, %v759
      %v761 = vpop.f32.mrb[0].mxu0
      %762 = vmatprep.mubr.f32.mxu0 0.0
      %763 = vmatmul.mubr.f32.gmra.mrb[0].mxu0 %v665
      %v764 = vpop.f32.mrb[0].mxu0
      %v765 = vadd.f32 %v646, %v764
      %v766 = vpop.f32.mrb[0].mxu0
      %767 = vmatprep.mubr.f32.mxu0 0.0
      %768 = vmatmul.mubr.f32.gmra.mrb[0].mxu0 %v668
      %v769 = vpop.f32.mrb[0].mxu0
      %v770 = vadd.f32 %v646, %v769
      %v771 = vpop.f32.mrb[0].mxu0
      %772 = vmatprep.mubr.f32.mxu0 0.0
      %773 = vmatmul.mubr.f32.gmra.mrb[0].mxu0 %v671
      %v774 = vpop.f32.mrb[0].mxu0
      %v775 = vadd.f32 %v646, %v774
      %v776 = vpop.f32.mrb[0].mxu0
      %777 = vdwg.mxu0
      %778 = vxpose.xlu0.b32.start [1/16] %v740, 128
      %779 = vxpose.xlu0.b32.cont [2/16] %v745, 128
      %780 = vxpose.xlu0.b32.cont [3/16] %v750, 128
      %781 = vxpose.xlu0.b32.cont [4/16] %v755, 128
      %782 = vxpose.xlu0.b32.cont [5/16] %v760, 128
      %783 = vxpose.xlu0.b32.cont [6/16] %v765, 128
      %784 = vxpose.xlu0.b32.cont [7/16] %v770, 128
      %785 = vxpose.xlu0.b32.cont [8/16] %v775, 128
      %786 = vxpose.xlu0.b32.cont [9/16] 0.0, 128
      %787 = vxpose.xlu0.b32.cont [10/16] 0.0, 128
      %788 = vxpose.xlu0.b32.cont [11/16] 0.0, 128
      %789 = vxpose.xlu0.b32.cont [12/16] 0.0, 128
      %790 = vxpose.xlu0.b32.cont [13/16] 0.0, 128
      %791 = vxpose.xlu0.b32.cont [14/16] 0.0, 128
      %792 = vxpose.xlu0.b32.cont [15/16] 0.0, 128
      %793 = vxpose.xlu0.b32.end [16/16] 0.0, 128
      %v794 = vpop.trf.xlu0
      %v795 = vpop.trf.xlu0
      %v796 = vpop.trf.xlu0
      %v797 = vpop.trf.xlu0
      %v798 = vpop.trf.xlu0
      %v799 = vpop.trf.xlu0
      %v800 = vpop.trf.xlu0
      %v801 = vpop.trf.xlu0
      %v802 = vpop.trf.xlu0
      %v803 = vpop.trf.xlu0
      %v804 = vpop.trf.xlu0
      %v805 = vpop.trf.xlu0
      %v806 = vpop.trf.xlu0
      %v807 = vpop.trf.xlu0
      %v808 = vpop.trf.xlu0
      %v809 = vpop.trf.xlu0
      %vm810 = vcmask 31744
      %v812 = vsel %vm810, %v740, 0
      %v815 = vsel %vm810, %v745, 0
      %v818 = vsel %vm810, %v750, 0
      %v821 = vsel %vm810, %v755, 0
      %v824 = vsel %vm810, %v760, 0
      %v827 = vsel %vm810, %v765, 0
      %v830 = vsel %vm810, %v770, 0
      %v833 = vsel %vm810, %v775, 0
      %vm835 = vcmask 1043456
      %v837 = vsel %vm835, %v794, 0
      %839 = vmatprep.subr.mxu0 0.0
      %840 = vmatpush1.msra.mxu0 %v837
      %841 = vmatprep.subr.mxu0 0.0
      %842 = vmatpush1.msra.mxu0 0.0
      %843 = vmatprep.subr.mxu0 0.0
      %844 = vmatpush1.msra.mxu0 0.0
      %845 = vmatprep.subr.mxu0 0.0
      %846 = vmatpush1.msra.mxu0 0.0
      %847 = vmatprep.subr.mxu0 0.0
      %848 = vmatpush1.msra.mxu0 0.0
      %849 = vmatprep.subr.mxu0 0.0
      %850 = vmatpush1.msra.mxu0 0.0
      %851 = vmatprep.subr.mxu0 0.0
      %852 = vmatpush1.msra.mxu0 0.0
      %853 = vmatprep.subr.mxu0 0.0
      %854 = vmatpush1.msra.mxu0 0.0
      %855 = vmatprep.subr.mxu0 0.0
      %856 = vmatpush1.msra.mxu0 0.0
      %857 = vmatprep.subr.mxu0 0.0
      %858 = vmatpush1.msra.mxu0 0.0
      %859 = vmatprep.subr.mxu0 0.0
      %860 = vmatpush1.msra.mxu0 0.0
      %861 = vmatprep.subr.mxu0 0.0
      %862 = vmatpush1.msra.mxu0 0.0
      %863 = vmatprep.subr.mxu0 0.0
      %864 = vmatpush1.msra.mxu0 0.0
      %865 = vmatprep.subr.mxu0 0.0
      %866 = vmatpush1.msra.mxu0 0.0
      %867 = vmatprep.subr.mxu0 0.0
      %868 = vmatpush1.msra.mxu0 0.0
      %869 = vmatprep.subr.mxu0 0.0
      %870 = vmatpush1.msra.mxu0 0.0
      %871 = vmatprep.subr.mxu0 0.0
      %872 = vmatpush1.msra.mxu0 0.0
      %873 = vmatprep.subr.mxu0 0.0
      %874 = vmatpush1.msra.mxu0 0.0
      %875 = vmatprep.subr.mxu0 0.0
      %876 = vmatpush1.msra.mxu0 0.0
      %877 = vmatprep.subr.mxu0 0.0
      %878 = vmatpush1.msra.mxu0 0.0
      %879 = vmatprep.subr.mxu0 0.0
      %880 = vmatpush1.msra.mxu0 0.0
      %881 = vmatprep.subr.mxu0 0.0
      %882 = vmatpush1.msra.mxu0 0.0
      %883 = vmatprep.subr.mxu0 0.0
      %884 = vmatpush1.msra.mxu0 0.0
      %885 = vmatprep.subr.mxu0 0.0
      %886 = vmatpush1.msra.mxu0 0.0
      %887 = vmatprep.subr.mxu0 0.0
      %888 = vmatpush1.msra.mxu0 0.0
      %889 = vmatprep.subr.mxu0 0.0
      %890 = vmatpush1.msra.mxu0 0.0
      %891 = vmatprep.subr.mxu0 0.0
      %892 = vmatpush1.msra.mxu0 0.0
      %893 = vmatprep.subr.mxu0 0.0
      %894 = vmatpush1.msra.mxu0 0.0
      %895 = vmatprep.subr.mxu0 0.0
      %896 = vmatpush1.msra.mxu0 0.0
      %897 = vmatprep.subr.mxu0 0.0
      %898 = vmatpush1.msra.mxu0 0.0
      %899 = vmatprep.subr.mxu0 0.0
      %900 = vmatpush1.msra.mxu0 0.0
      %901 = vmatprep.subr.mxu0 0.0
      %902 = vmatpush1.msra.mxu0 0.0
      %903 = vmatprep.mubr.f32.mxu0 0.0
      %904 = vmatmul.mubr.f32.gmra.mrb[0].mxu0 %v812
      %v905 = vpop.f32.mrb[0].mxu0
      %v906 = vadd.f32 0.0, %v905
      %v907 = vpop.f32.mrb[0].mxu0
      %908 = vmatprep.mubr.f32.mxu0 0.0
      %909 = vmatmul.mubr.f32.gmra.mrb[0].mxu0 %v815
      %v910 = vpop.f32.mrb[0].mxu0
      %v911 = vadd.f32 0.0, %v910
      %v912 = vpop.f32.mrb[0].mxu0
      %913 = vmatprep.mubr.f32.mxu0 0.0
      %914 = vmatmul.mubr.f32.gmra.mrb[0].mxu0 %v818
      %v915 = vpop.f32.mrb[0].mxu0
      %v916 = vadd.f32 0.0, %v915
      %v917 = vpop.f32.mrb[0].mxu0
      %918 = vmatprep.mubr.f32.mxu0 0.0
      %919 = vmatmul.mubr.f32.gmra.mrb[0].mxu0 %v821
      %v920 = vpop.f32.mrb[0].mxu0
      %v921 = vadd.f32 0.0, %v920
      %v922 = vpop.f32.mrb[0].mxu0
      %923 = vmatprep.mubr.f32.mxu0 0.0
      %924 = vmatmul.mubr.f32.gmra.mrb[0].mxu0 %v824
      %v925 = vpop.f32.mrb[0].mxu0
      %v926 = vadd.f32 0.0, %v925
      %v927 = vpop.f32.mrb[0].mxu0
      %928 = vmatprep.mubr.f32.mxu0 0.0
      %929 = vmatmul.mubr.f32.gmra.mrb[0].mxu0 %v827
      %v930 = vpop.f32.mrb[0].mxu0
      %v931 = vadd.f32 0.0, %v930
      %v932 = vpop.f32.mrb[0].mxu0
      %933 = vmatprep.mubr.f32.mxu0 0.0
      %934 = vmatmul.mubr.f32.gmra.mrb[0].mxu0 %v830
      %v935 = vpop.f32.mrb[0].mxu0
      %v936 = vadd.f32 0.0, %v935
      %v937 = vpop.f32.mrb[0].mxu0
      %938 = vmatprep.mubr.f32.mxu0 0.0
      %939 = vmatmul.mubr.f32.gmra.mrb[0].mxu0 %v833
      %v940 = vpop.f32.mrb[0].mxu0
      %v941 = vadd.f32 0.0, %v940
      %v942 = vpop.f32.mrb[0].mxu0
      %943 = vdwg.mxu0
      %v944 = vmul.f32 %v740, %v740
      %v945 = vmul.f32 %v745, %v745
      %v946 = vmul.f32 %v750, %v750
      %v947 = vmul.f32 %v755, %v755
      %v948 = vmul.f32 %v760, %v760
      %v949 = vmul.f32 %v765, %v765
      %v950 = vmul.f32 %v770, %v770
      %v951 = vmul.f32 %v775, %v775
      %v952 = vsel %vm810, %v944, 0.0
      %953 = vadd.xlane.f32.xlu0 %v952
      %v954 = vpop.xlane.xlu0 %953
      %v955 = vsel %vm810, %v945, 0.0
      %956 = vadd.xlane.f32.xlu0 %v955
      %v957 = vpop.xlane.xlu0 %956
      %v958 = vsel %vm810, %v946, 0.0
      %959 = vadd.xlane.f32.xlu0 %v958
      %v960 = vpop.xlane.xlu0 %959
      %v961 = vsel %vm810, %v947, 0.0
      %962 = vadd.xlane.f32.xlu0 %v961
      %v963 = vpop.xlane.xlu0 %962
      %v964 = vsel %vm810, %v948, 0.0
      %965 = vadd.xlane.f32.xlu0 %v964
      %v966 = vpop.xlane.xlu0 %965
      %v967 = vsel %vm810, %v949, 0.0
      %968 = vadd.xlane.f32.xlu0 %v967
      %v969 = vpop.xlane.xlu0 %968
      %v970 = vsel %vm810, %v950, 0.0
      %971 = vadd.xlane.f32.xlu0 %v970
      %v972 = vpop.xlane.xlu0 %971
      %v973 = vsel %vm810, %v951, 0.0
      %974 = vadd.xlane.f32.xlu0 %v973
      %v975 = vpop.xlane.xlu0 %974
      %v976 = vmul.f32 %v794, %v794
      %vm977 = vcmask 519168
      %v978 = vsel %vm977, %v976, 0.0
      %v979 = vrot.slane %v978, 4
      %v980 = vadd.f32 %v978, %v979
      %v981 = vrot.slane %v980, 2
      %v982 = vadd.f32 %v980, %v981
      %v983 = vrot.slane %v982, 1
      %v984 = vadd.f32 %v982, %v983
      %v985 = vadd.f32 %v954, %v984
      %v986 = vadd.f32 %v957, %v984
      %v987 = vadd.f32 %v960, %v984
      %v988 = vadd.f32 %v963, %v984
      %v989 = vadd.f32 %v966, %v984
      %v990 = vadd.f32 %v969, %v984
      %v991 = vadd.f32 %v972, %v984
      %v992 = vadd.f32 %v975, %v984
      %v993 = vmul.f32 %v906, 2.0
      %v994 = vmul.f32 %v911, 2.0
      %v995 = vmul.f32 %v916, 2.0
      %v996 = vmul.f32 %v921, 2.0
      %v997 = vmul.f32 %v926, 2.0
      %v998 = vmul.f32 %v931, 2.0
      %v999 = vmul.f32 %v936, 2.0
      %v1000 = vmul.f32 %v941, 2.0
      %v1001 = vsub.f32 %v985, %v993
      %v1002 = vsub.f32 %v986, %v994
      %v1003 = vsub.f32 %v987, %v995
      %v1004 = vsub.f32 %v988, %v996
      %v1005 = vsub.f32 %v989, %v997
      %v1006 = vsub.f32 %v990, %v998
      %v1007 = vsub.f32 %v991, %v999
      %v1008 = vsub.f32 %v992, %v1000
      %v1009 = vmax.f32 %v1001, 0.0
      %v1010 = vmax.f32 %v1002, 0.0
      %v1011 = vmax.f32 %v1003, 0.0
      %v1012 = vmax.f32 %v1004, 0.0
      %v1013 = vmax.f32 %v1005, 0.0
      %v1014 = vmax.f32 %v1006, 0.0
      %v1015 = vmax.f32 %v1007, 0.0
      %v1016 = vmax.f32 %v1008, 0.0
      %v1017 = vmul.f32 %v1009, -10.0
      %v1018 = vmul.f32 %v1010, -10.0
      %v1019 = vmul.f32 %v1011, -10.0
      %v1020 = vmul.f32 %v1012, -10.0
      %v1021 = vmul.f32 %v1013, -10.0
      %v1022 = vmul.f32 %v1014, -10.0
      %v1023 = vmul.f32 %v1015, -10.0
      %v1024 = vmul.f32 %v1016, -10.0
      %v1025 = vmul.f32 %v1017, 1.442695
      %v1026 = vpow.pop %v1025
      %v1027 = vmul.f32 %v1018, 1.442695
      %v1028 = vpow.pop %v1027
      %v1029 = vmul.f32 %v1019, 1.442695
      %v1030 = vpow.pop %v1029
      %v1031 = vmul.f32 %v1020, 1.442695
      %v1032 = vpow.pop %v1031
      %v1033 = vmul.f32 %v1021, 1.442695
      %v1034 = vpow.pop %v1033
      %v1035 = vmul.f32 %v1022, 1.442695
      %v1036 = vpow.pop %v1035
      %v1037 = vmul.f32 %v1023, 1.442695
      %v1038 = vpow.pop %v1037
      %v1039 = vmul.f32 %v1024, 1.442695
      %v1040 = vpow.pop %v1039
      %1041 = vrot.lane.b32.xlu0 %v740, 124
      %v1042 = vpop.permute.xlu0 %1041
      %1043 = vrot.lane.b32.xlu0 %v745, 124
      %v1044 = vpop.permute.xlu0 %1043
      %1045 = vrot.lane.b32.xlu0 %v750, 124
      %v1046 = vpop.permute.xlu0 %1045
      %1047 = vrot.lane.b32.xlu0 %v755, 124
      %v1048 = vpop.permute.xlu0 %1047
      %1049 = vrot.lane.b32.xlu0 %v760, 124
      %v1050 = vpop.permute.xlu0 %1049
      %1051 = vrot.lane.b32.xlu0 %v765, 124
      %v1052 = vpop.permute.xlu0 %1051
      %1053 = vrot.lane.b32.xlu0 %v770, 124
      %v1054 = vpop.permute.xlu0 %1053
      %1055 = vrot.lane.b32.xlu0 %v775, 124
      %v1056 = vpop.permute.xlu0 %1055
      %vm1065 = vcmask 523264
      %v1067 = vsel %vm1065, %v1026, 0
      %v1070 = vsel %vm1065, %v1028, 0
      %v1073 = vsel %vm1065, %v1030, 0
      %v1076 = vsel %vm1065, %v1032, 0
      %v1079 = vsel %vm1065, %v1034, 0
      %v1082 = vsel %vm1065, %v1036, 0
      %v1085 = vsel %vm1065, %v1038, 0
      %v1088 = vsel %vm1065, %v1040, 0
      %1090 = vmatprep.subr.mxu0 0.0
      %1091 = vmatpush1.msra.mxu0 %v1042
      %1092 = vmatprep.subr.mxu0 0.0
      %1093 = vmatpush1.msra.mxu0 %v1044
      %1094 = vmatprep.subr.mxu0 0.0
      %1095 = vmatpush1.msra.mxu0 %v1046
      %1096 = vmatprep.subr.mxu0 0.0
      %1097 = vmatpush1.msra.mxu0 %v1048
      %1098 = vmatprep.subr.mxu0 0.0
      %1099 = vmatpush1.msra.mxu0 %v1050
      %1100 = vmatprep.subr.mxu0 0.0
      %1101 = vmatpush1.msra.mxu0 %v1052
      %1102 = vmatprep.subr.mxu0 0.0
      %1103 = vmatpush1.msra.mxu0 %v1054
      %1104 = vmatprep.subr.mxu0 0.0
      %1105 = vmatpush1.msra.mxu0 %v1056
      %1106 = vmatprep.subr.mxu0 0.0
      %1107 = vmatpush1.msra.mxu0 0.0
      %1108 = vmatprep.subr.mxu0 0.0
      %1109 = vmatpush1.msra.mxu0 0.0
      %1110 = vmatprep.subr.mxu0 0.0
      %1111 = vmatpush1.msra.mxu0 0.0
      %1112 = vmatprep.subr.mxu0 0.0
      %1113 = vmatpush1.msra.mxu0 0.0
      %1114 = vmatprep.subr.mxu0 0.0
      %1115 = vmatpush1.msra.mxu0 0.0
      %1116 = vmatprep.subr.mxu0 0.0
      %1117 = vmatpush1.msra.mxu0 0.0
      %1118 = vmatprep.subr.mxu0 0.0
      %1119 = vmatpush1.msra.mxu0 0.0
      %1120 = vmatprep.subr.mxu0 0.0
      %1121 = vmatpush1.msra.mxu0 0.0
      %1122 = vmatprep.subr.mxu0 0.0
      %1123 = vmatpush1.msra.mxu0 0.0
      %1124 = vmatprep.subr.mxu0 0.0
      %1125 = vmatpush1.msra.mxu0 0.0
      %1126 = vmatprep.subr.mxu0 0.0
      %1127 = vmatpush1.msra.mxu0 0.0
      %1128 = vmatprep.subr.mxu0 0.0
      %1129 = vmatpush1.msra.mxu0 0.0
      %1130 = vmatprep.subr.mxu0 0.0
      %1131 = vmatpush1.msra.mxu0 0.0
      %1132 = vmatprep.subr.mxu0 0.0
      %1133 = vmatpush1.msra.mxu0 0.0
      %1134 = vmatprep.subr.mxu0 0.0
      %1135 = vmatpush1.msra.mxu0 0.0
      %1136 = vmatprep.subr.mxu0 0.0
      %1137 = vmatpush1.msra.mxu0 0.0
      %1138 = vmatprep.subr.mxu0 0.0
      %1139 = vmatpush1.msra.mxu0 0.0
      %1140 = vmatprep.subr.mxu0 0.0
      %1141 = vmatpush1.msra.mxu0 0.0
      %1142 = vmatprep.subr.mxu0 0.0
      %1143 = vmatpush1.msra.mxu0 0.0
      %1144 = vmatprep.subr.mxu0 0.0
      %1145 = vmatpush1.msra.mxu0 0.0
      %1146 = vmatprep.subr.mxu0 0.0
      %1147 = vmatpush1.msra.mxu0 0.0
      %1148 = vmatprep.subr.mxu0 0.0
      %1149 = vmatpush1.msra.mxu0 0.0
      %1150 = vmatprep.subr.mxu0 0.0
      %1151 = vmatpush1.msra.mxu0 0.0
      %1152 = vmatprep.subr.mxu0 0.0
      %1153 = vmatpush1.msra.mxu0 0.0
      %1154 = vmatprep.mubr.f32.mxu0 0.0
      %1155 = vmatmul.mubr.f32.gmra.mrb[0].mxu0 %v1067
      %v1156 = vpop.f32.mrb[0].mxu0
      %v1157 = vadd.f32 0.0, %v1156
      %v1158 = vpop.f32.mrb[0].mxu0
      %1159 = vmatprep.mubr.f32.mxu0 0.0
      %1160 = vmatmul.mubr.f32.gmra.mrb[0].mxu0 %v1070
      %v1161 = vpop.f32.mrb[0].mxu0
      %v1162 = vadd.f32 0.0, %v1161
      %v1163 = vpop.f32.mrb[0].mxu0
      %1164 = vmatprep.mubr.f32.mxu0 0.0
      %1165 = vmatmul.mubr.f32.gmra.mrb[0].mxu0 %v1073
      %v1166 = vpop.f32.mrb[0].mxu0
      %v1167 = vadd.f32 0.0, %v1166
      %v1168 = vpop.f32.mrb[0].mxu0
      %1169 = vmatprep.mubr.f32.mxu0 0.0
      %1170 = vmatmul.mubr.f32.gmra.mrb[0].mxu0 %v1076
      %v1171 = vpop.f32.mrb[0].mxu0
      %v1172 = vadd.f32 0.0, %v1171
      %v1173 = vpop.f32.mrb[0].mxu0
      %1174 = vmatprep.mubr.f32.mxu0 0.0
      %1175 = vmatmul.mubr.f32.gmra.mrb[0].mxu0 %v1079
      %v1176 = vpop.f32.mrb[0].mxu0
      %v1177 = vadd.f32 0.0, %v1176
      %v1178 = vpop.f32.mrb[0].mxu0
      %1179 = vmatprep.mubr.f32.mxu0 0.0
      %1180 = vmatmul.mubr.f32.gmra.mrb[0].mxu0 %v1082
      %v1181 = vpop.f32.mrb[0].mxu0
      %v1182 = vadd.f32 0.0, %v1181
      %v1183 = vpop.f32.mrb[0].mxu0
      %1184 = vmatprep.mubr.f32.mxu0 0.0
      %1185 = vmatmul.mubr.f32.gmra.mrb[0].mxu0 %v1085
      %v1186 = vpop.f32.mrb[0].mxu0
      %v1187 = vadd.f32 0.0, %v1186
      %v1188 = vpop.f32.mrb[0].mxu0
      %1189 = vmatprep.mubr.f32.mxu0 0.0
      %1190 = vmatmul.mubr.f32.gmra.mrb[0].mxu0 %v1088
      %v1191 = vpop.f32.mrb[0].mxu0
      %v1192 = vadd.f32 0.0, %v1191
      %v1193 = vpop.f32.mrb[0].mxu0
      %1194 = vdwg.mxu0
      %v1195 = vmul.f32 %v1157, 0.015625
      %v1196 = vmul.f32 %v1162, 0.015625
      %v1197 = vmul.f32 %v1167, 0.015625
      %v1198 = vmul.f32 %v1172, 0.015625
      %v1199 = vmul.f32 %v1177, 0.015625
      %v1200 = vmul.f32 %v1182, 0.015625
      %v1201 = vmul.f32 %v1187, 0.015625
      %v1202 = vmul.f32 %v1192, 0.015625
      %1203 = vset.pattern.permute.xlu0 4
      %1204 = vperm.xlu0 %1203, %v740
      %v1205 = vpop.permute.xlu0 %1204
      %1207 = vset.pattern.permute.xlu0 4
      %1208 = vperm.xlu0 %1207, %v745
      %v1209 = vpop.permute.xlu0 %1208
      %1211 = vset.pattern.permute.xlu0 4
      %1212 = vperm.xlu0 %1211, %v750
      %v1213 = vpop.permute.xlu0 %1212
      %1215 = vset.pattern.permute.xlu0 4
      %1216 = vperm.xlu0 %1215, %v755
      %v1217 = vpop.permute.xlu0 %1216
      %1219 = vset.pattern.permute.xlu0 4
      %1220 = vperm.xlu0 %1219, %v760
      %v1221 = vpop.permute.xlu0 %1220
      %1223 = vset.pattern.permute.xlu0 4
      %1224 = vperm.xlu0 %1223, %v765
      %v1225 = vpop.permute.xlu0 %1224
      %1227 = vset.pattern.permute.xlu0 4
      %1228 = vperm.xlu0 %1227, %v770
      %v1229 = vpop.permute.xlu0 %1228
      %1231 = vset.pattern.permute.xlu0 4
      %1232 = vperm.xlu0 %1231, %v775
      %v1233 = vpop.permute.xlu0 %1232
      %v1235 = vmul.f32 %v1026, %v1205
      %v1236 = vmul.f32 %v1028, %v1209
      %v1237 = vmul.f32 %v1030, %v1213
      %v1238 = vmul.f32 %v1032, %v1217
      %v1239 = vmul.f32 %v1034, %v1221
      %v1240 = vmul.f32 %v1036, %v1225
      %v1241 = vmul.f32 %v1038, %v1229
      %v1242 = vmul.f32 %v1040, %v1233
      %v1243 = vsel %vm1065, %v1235, -inf
      %v1244 = vsel %vm1065, %v1236, -inf
      %v1245 = vsel %vm1065, %v1237, -inf
      %v1246 = vsel %vm1065, %v1238, -inf
      %v1247 = vsel %vm1065, %v1239, -inf
      %v1248 = vmax.f32 %v1243, %v1247
      %v1249 = vsel %vm1065, %v1240, -inf
      %v1250 = vmax.f32 %v1244, %v1249
      %v1251 = vsel %vm1065, %v1241, -inf
      %v1252 = vmax.f32 %v1245, %v1251
      %v1253 = vsel %vm1065, %v1242, -inf
      %v1254 = vmax.f32 %v1246, %v1253
      %v1255 = vmax.f32 %v1248, %v1250
      %v1256 = vmax.f32 %v1252, %v1254
      %v1257 = vmax.f32 %v1255, %v1256
      %v1258 = vrot.slane %v1257, 4
      %v1259 = vmax.f32 %v1257, %v1258
      %v1260 = vrot.slane %v1259, 2
      %v1261 = vmax.f32 %v1259, %v1260
      %v1262 = vrot.slane %v1261, 1
      %v1263 = vmax.f32 %v1261, %v1262
      %1264 = vset.pattern.permute.xlu0 5
      %1265 = vperm.xlu0 %1264, %v740
      %v1266 = vpop.permute.xlu0 %1265
      %1268 = vset.pattern.permute.xlu0 5
      %1269 = vperm.xlu0 %1268, %v745
      %v1270 = vpop.permute.xlu0 %1269
      %1272 = vset.pattern.permute.xlu0 5
      %1273 = vperm.xlu0 %1272, %v750
      %v1274 = vpop.permute.xlu0 %1273
      %1276 = vset.pattern.permute.xlu0 5
      %1277 = vperm.xlu0 %1276, %v755
      %v1278 = vpop.permute.xlu0 %1277
      %1280 = vset.pattern.permute.xlu0 5
      %1281 = vperm.xlu0 %1280, %v760
      %v1282 = vpop.permute.xlu0 %1281
      %1284 = vset.pattern.permute.xlu0 5
      %1285 = vperm.xlu0 %1284, %v765
      %v1286 = vpop.permute.xlu0 %1285
      %1288 = vset.pattern.permute.xlu0 5
      %1289 = vperm.xlu0 %1288, %v770
      %v1290 = vpop.permute.xlu0 %1289
      %1292 = vset.pattern.permute.xlu0 5
      %1293 = vperm.xlu0 %1292, %v775
      %v1294 = vpop.permute.xlu0 %1293
      %v1296 = vmul.f32 %v1026, %v1266
      %v1297 = vmul.f32 %v1028, %v1270
      %v1298 = vmul.f32 %v1030, %v1274
      %v1299 = vmul.f32 %v1032, %v1278
      %v1300 = vmul.f32 %v1034, %v1282
      %v1301 = vmul.f32 %v1036, %v1286
      %v1302 = vmul.f32 %v1038, %v1290
      %v1303 = vmul.f32 %v1040, %v1294
      %v1304 = vsel %vm1065, %v1296, -inf
      %v1305 = vsel %vm1065, %v1297, -inf
      %v1306 = vsel %vm1065, %v1298, -inf
      %v1307 = vsel %vm1065, %v1299, -inf
      %v1308 = vsel %vm1065, %v1300, -inf
      %v1309 = vmax.f32 %v1304, %v1308
      %v1310 = vsel %vm1065, %v1301, -inf
      %v1311 = vmax.f32 %v1305, %v1310
      %v1312 = vsel %vm1065, %v1302, -inf
      %v1313 = vmax.f32 %v1306, %v1312
      %v1314 = vsel %vm1065, %v1303, -inf
      %v1315 = vmax.f32 %v1307, %v1314
      %v1316 = vmax.f32 %v1309, %v1311
      %v1317 = vmax.f32 %v1313, %v1315
      %v1318 = vmax.f32 %v1316, %v1317
      %v1319 = vrot.slane %v1318, 4
      %v1320 = vmax.f32 %v1318, %v1319
      %v1321 = vrot.slane %v1320, 2
      %v1322 = vmax.f32 %v1320, %v1321
      %v1323 = vrot.slane %v1322, 1
      %v1324 = vmax.f32 %v1322, %v1323
      %1325 = vset.pattern.permute.xlu0 6
      %1326 = vperm.xlu0 %1325, %v740
      %v1327 = vpop.permute.xlu0 %1326
      %1329 = vset.pattern.permute.xlu0 6
      %1330 = vperm.xlu0 %1329, %v745
      %v1331 = vpop.permute.xlu0 %1330
      %1333 = vset.pattern.permute.xlu0 6
      %1334 = vperm.xlu0 %1333, %v750
      %v1335 = vpop.permute.xlu0 %1334
      %1337 = vset.pattern.permute.xlu0 6
      %1338 = vperm.xlu0 %1337, %v755
      %v1339 = vpop.permute.xlu0 %1338
      %1341 = vset.pattern.permute.xlu0 6
      %1342 = vperm.xlu0 %1341, %v760
      %v1343 = vpop.permute.xlu0 %1342
      %1345 = vset.pattern.permute.xlu0 6
      %1346 = vperm.xlu0 %1345, %v765
      %v1347 = vpop.permute.xlu0 %1346
      %1349 = vset.pattern.permute.xlu0 6
      %1350 = vperm.xlu0 %1349, %v770
      %v1351 = vpop.permute.xlu0 %1350
      %1353 = vset.pattern.permute.xlu0 6
      %1354 = vperm.xlu0 %1353, %v775
      %v1355 = vpop.permute.xlu0 %1354
      %v1357 = vmul.f32 %v1026, %v1327
      %v1358 = vmul.f32 %v1028, %v1331
      %v1359 = vmul.f32 %v1030, %v1335
      %v1360 = vmul.f32 %v1032, %v1339
      %v1361 = vmul.f32 %v1034, %v1343
      %v1362 = vmul.f32 %v1036, %v1347
      %v1363 = vmul.f32 %v1038, %v1351
      %v1364 = vmul.f32 %v1040, %v1355
      %v1365 = vsel %vm1065, %v1357, -inf
      %v1366 = vsel %vm1065, %v1358, -inf
      %v1367 = vsel %vm1065, %v1359, -inf
      %v1368 = vsel %vm1065, %v1360, -inf
      %v1369 = vsel %vm1065, %v1361, -inf
      %v1370 = vmax.f32 %v1365, %v1369
      %v1371 = vsel %vm1065, %v1362, -inf
      %v1372 = vmax.f32 %v1366, %v1371
      %v1373 = vsel %vm1065, %v1363, -inf
      %v1374 = vmax.f32 %v1367, %v1373
      %v1375 = vsel %vm1065, %v1364, -inf
      %v1376 = vmax.f32 %v1368, %v1375
      %v1377 = vmax.f32 %v1370, %v1372
      %v1378 = vmax.f32 %v1374, %v1376
      %v1379 = vmax.f32 %v1377, %v1378
      %v1380 = vrot.slane %v1379, 4
      %v1381 = vmax.f32 %v1379, %v1380
      %v1382 = vrot.slane %v1381, 2
      %v1383 = vmax.f32 %v1381, %v1382
      %v1384 = vrot.slane %v1383, 1
      %v1385 = vmax.f32 %v1383, %v1384
      %1386 = vset.pattern.permute.xlu0 7
      %1387 = vperm.xlu0 %1386, %v740
      %v1388 = vpop.permute.xlu0 %1387
      %1390 = vset.pattern.permute.xlu0 7
      %1391 = vperm.xlu0 %1390, %v745
      %v1392 = vpop.permute.xlu0 %1391
      %1394 = vset.pattern.permute.xlu0 7
      %1395 = vperm.xlu0 %1394, %v750
      %v1396 = vpop.permute.xlu0 %1395
      %1398 = vset.pattern.permute.xlu0 7
      %1399 = vperm.xlu0 %1398, %v755
      %v1400 = vpop.permute.xlu0 %1399
      %1402 = vset.pattern.permute.xlu0 7
      %1403 = vperm.xlu0 %1402, %v760
      %v1404 = vpop.permute.xlu0 %1403
      %1406 = vset.pattern.permute.xlu0 7
      %1407 = vperm.xlu0 %1406, %v765
      %v1408 = vpop.permute.xlu0 %1407
      %1410 = vset.pattern.permute.xlu0 7
      %1411 = vperm.xlu0 %1410, %v770
      %v1412 = vpop.permute.xlu0 %1411
      %1414 = vset.pattern.permute.xlu0 7
      %1415 = vperm.xlu0 %1414, %v775
      %v1416 = vpop.permute.xlu0 %1415
      %v1418 = vmul.f32 %v1026, %v1388
      %v1419 = vmul.f32 %v1028, %v1392
      %v1420 = vmul.f32 %v1030, %v1396
      %v1421 = vmul.f32 %v1032, %v1400
      %v1422 = vmul.f32 %v1034, %v1404
      %v1423 = vmul.f32 %v1036, %v1408
      %v1424 = vmul.f32 %v1038, %v1412
      %v1425 = vmul.f32 %v1040, %v1416
      %v1426 = vsel %vm1065, %v1418, -inf
      %v1427 = vsel %vm1065, %v1419, -inf
      %v1428 = vsel %vm1065, %v1420, -inf
      %v1429 = vsel %vm1065, %v1421, -inf
      %v1430 = vsel %vm1065, %v1422, -inf
      %v1431 = vmax.f32 %v1426, %v1430
      %v1432 = vsel %vm1065, %v1423, -inf
      %v1433 = vmax.f32 %v1427, %v1432
      %v1434 = vsel %vm1065, %v1424, -inf
      %v1435 = vmax.f32 %v1428, %v1434
      %v1436 = vsel %vm1065, %v1425, -inf
      %v1437 = vmax.f32 %v1429, %v1436
      %v1438 = vmax.f32 %v1431, %v1433
      %v1439 = vmax.f32 %v1435, %v1437
      %v1440 = vmax.f32 %v1438, %v1439
      %v1441 = vrot.slane %v1440, 4
      %v1442 = vmax.f32 %v1440, %v1441
      %v1443 = vrot.slane %v1442, 2
      %v1444 = vmax.f32 %v1442, %v1443
      %v1445 = vrot.slane %v1444, 1
      %v1446 = vmax.f32 %v1444, %v1445
      %1447 = vset.pattern.permute.xlu0 8
      %1448 = vperm.xlu0 %1447, %v740
      %v1449 = vpop.permute.xlu0 %1448
      %1451 = vset.pattern.permute.xlu0 8
      %1452 = vperm.xlu0 %1451, %v745
      %v1453 = vpop.permute.xlu0 %1452
      %1455 = vset.pattern.permute.xlu0 8
      %1456 = vperm.xlu0 %1455, %v750
      %v1457 = vpop.permute.xlu0 %1456
      %1459 = vset.pattern.permute.xlu0 8
      %1460 = vperm.xlu0 %1459, %v755
      %v1461 = vpop.permute.xlu0 %1460
      %1463 = vset.pattern.permute.xlu0 8
      %1464 = vperm.xlu0 %1463, %v760
      %v1465 = vpop.permute.xlu0 %1464
      %1467 = vset.pattern.permute.xlu0 8
      %1468 = vperm.xlu0 %1467, %v765
      %v1469 = vpop.permute.xlu0 %1468
      %1471 = vset.pattern.permute.xlu0 8
      %1472 = vperm.xlu0 %1471, %v770
      %v1473 = vpop.permute.xlu0 %1472
      %1475 = vset.pattern.permute.xlu0 8
      %1476 = vperm.xlu0 %1475, %v775
      %v1477 = vpop.permute.xlu0 %1476
      %v1479 = vmul.f32 %v1026, %v1449
      %v1480 = vmul.f32 %v1028, %v1453
      %v1481 = vmul.f32 %v1030, %v1457
      %v1482 = vmul.f32 %v1032, %v1461
      %v1483 = vmul.f32 %v1034, %v1465
      %v1484 = vmul.f32 %v1036, %v1469
      %v1485 = vmul.f32 %v1038, %v1473
      %v1486 = vmul.f32 %v1040, %v1477
      %v1487 = vsel %vm1065, %v1479, -inf
      %v1488 = vsel %vm1065, %v1480, -inf
      %v1489 = vsel %vm1065, %v1481, -inf
      %v1490 = vsel %vm1065, %v1482, -inf
      %v1491 = vsel %vm1065, %v1483, -inf
      %v1492 = vmax.f32 %v1487, %v1491
      %v1493 = vsel %vm1065, %v1484, -inf
      %v1494 = vmax.f32 %v1488, %v1493
      %v1495 = vsel %vm1065, %v1485, -inf
      %v1496 = vmax.f32 %v1489, %v1495
      %v1497 = vsel %vm1065, %v1486, -inf
      %v1498 = vmax.f32 %v1490, %v1497
      %v1499 = vmax.f32 %v1492, %v1494
      %v1500 = vmax.f32 %v1496, %v1498
      %v1501 = vmax.f32 %v1499, %v1500
      %v1502 = vrot.slane %v1501, 4
      %v1503 = vmax.f32 %v1501, %v1502
      %v1504 = vrot.slane %v1503, 2
      %v1505 = vmax.f32 %v1503, %v1504
      %v1506 = vrot.slane %v1505, 1
      %v1507 = vmax.f32 %v1505, %v1506
      %1508 = vset.pattern.permute.xlu0 9
      %1509 = vperm.xlu0 %1508, %v740
      %v1510 = vpop.permute.xlu0 %1509
      %1512 = vset.pattern.permute.xlu0 9
      %1513 = vperm.xlu0 %1512, %v745
      %v1514 = vpop.permute.xlu0 %1513
      %1516 = vset.pattern.permute.xlu0 9
      %1517 = vperm.xlu0 %1516, %v750
      %v1518 = vpop.permute.xlu0 %1517
      %1520 = vset.pattern.permute.xlu0 9
      %1521 = vperm.xlu0 %1520, %v755
      %v1522 = vpop.permute.xlu0 %1521
      %1524 = vset.pattern.permute.xlu0 9
      %1525 = vperm.xlu0 %1524, %v760
      %v1526 = vpop.permute.xlu0 %1525
      %1528 = vset.pattern.permute.xlu0 9
      %1529 = vperm.xlu0 %1528, %v765
      %v1530 = vpop.permute.xlu0 %1529
      %1532 = vset.pattern.permute.xlu0 9
      %1533 = vperm.xlu0 %1532, %v770
      %v1534 = vpop.permute.xlu0 %1533
      %1536 = vset.pattern.permute.xlu0 9
      %1537 = vperm.xlu0 %1536, %v775
      %v1538 = vpop.permute.xlu0 %1537
      %v1540 = vmul.f32 %v1026, %v1510
      %v1541 = vmul.f32 %v1028, %v1514
      %v1542 = vmul.f32 %v1030, %v1518
      %v1543 = vmul.f32 %v1032, %v1522
      %v1544 = vmul.f32 %v1034, %v1526
      %v1545 = vmul.f32 %v1036, %v1530
      %v1546 = vmul.f32 %v1038, %v1534
      %v1547 = vmul.f32 %v1040, %v1538
      %v1548 = vsel %vm1065, %v1540, -inf
      %v1549 = vsel %vm1065, %v1541, -inf
      %v1550 = vsel %vm1065, %v1542, -inf
      %v1551 = vsel %vm1065, %v1543, -inf
      %v1552 = vsel %vm1065, %v1544, -inf
      %v1553 = vmax.f32 %v1548, %v1552
      %v1554 = vsel %vm1065, %v1545, -inf
      %v1555 = vmax.f32 %v1549, %v1554
      %v1556 = vsel %vm1065, %v1546, -inf
      %v1557 = vmax.f32 %v1550, %v1556
      %v1558 = vsel %vm1065, %v1547, -inf
      %v1559 = vmax.f32 %v1551, %v1558
      %v1560 = vmax.f32 %v1553, %v1555
      %v1561 = vmax.f32 %v1557, %v1559
      %v1562 = vmax.f32 %v1560, %v1561
      %v1563 = vrot.slane %v1562, 4
      %v1564 = vmax.f32 %v1562, %v1563
      %v1565 = vrot.slane %v1564, 2
      %v1566 = vmax.f32 %v1564, %v1565
      %v1567 = vrot.slane %v1566, 1
      %v1568 = vmax.f32 %v1566, %v1567
      %1569 = vset.pattern.permute.xlu0 10
      %1570 = vperm.xlu0 %1569, %v740
      %v1571 = vpop.permute.xlu0 %1570
      %1573 = vset.pattern.permute.xlu0 10
      %1574 = vperm.xlu0 %1573, %v745
      %v1575 = vpop.permute.xlu0 %1574
      %1577 = vset.pattern.permute.xlu0 10
      %1578 = vperm.xlu0 %1577, %v750
      %v1579 = vpop.permute.xlu0 %1578
      %1581 = vset.pattern.permute.xlu0 10
      %1582 = vperm.xlu0 %1581, %v755
      %v1583 = vpop.permute.xlu0 %1582
      %1585 = vset.pattern.permute.xlu0 10
      %1586 = vperm.xlu0 %1585, %v760
      %v1587 = vpop.permute.xlu0 %1586
      %1589 = vset.pattern.permute.xlu0 10
      %1590 = vperm.xlu0 %1589, %v765
      %v1591 = vpop.permute.xlu0 %1590
      %1593 = vset.pattern.permute.xlu0 10
      %1594 = vperm.xlu0 %1593, %v770
      %v1595 = vpop.permute.xlu0 %1594
      %1597 = vset.pattern.permute.xlu0 10
      %1598 = vperm.xlu0 %1597, %v775
      %v1599 = vpop.permute.xlu0 %1598
      %v1601 = vmul.f32 %v1026, %v1571
      %v1602 = vmul.f32 %v1028, %v1575
      %v1603 = vmul.f32 %v1030, %v1579
      %v1604 = vmul.f32 %v1032, %v1583
      %v1605 = vmul.f32 %v1034, %v1587
      %v1606 = vmul.f32 %v1036, %v1591
      %v1607 = vmul.f32 %v1038, %v1595
      %v1608 = vmul.f32 %v1040, %v1599
      %v1609 = vsel %vm1065, %v1601, -inf
      %v1610 = vsel %vm1065, %v1602, -inf
      %v1611 = vsel %vm1065, %v1603, -inf
      %v1612 = vsel %vm1065, %v1604, -inf
      %v1613 = vsel %vm1065, %v1605, -inf
      %v1614 = vmax.f32 %v1609, %v1613
      %v1615 = vsel %vm1065, %v1606, -inf
      %v1616 = vmax.f32 %v1610, %v1615
      %v1617 = vsel %vm1065, %v1607, -inf
      %v1618 = vmax.f32 %v1611, %v1617
      %v1619 = vsel %vm1065, %v1608, -inf
      %v1620 = vmax.f32 %v1612, %v1619
      %v1621 = vmax.f32 %v1614, %v1616
      %v1622 = vmax.f32 %v1618, %v1620
      %v1623 = vmax.f32 %v1621, %v1622
      %v1624 = vrot.slane %v1623, 4
      %v1625 = vmax.f32 %v1623, %v1624
      %v1626 = vrot.slane %v1625, 2
      %v1627 = vmax.f32 %v1625, %v1626
      %v1628 = vrot.slane %v1627, 1
      %v1629 = vmax.f32 %v1627, %v1628
      %1630 = vset.pattern.permute.xlu0 11
      %1631 = vperm.xlu0 %1630, %v740
      %v1632 = vpop.permute.xlu0 %1631
      %1634 = vset.pattern.permute.xlu0 11
      %1635 = vperm.xlu0 %1634, %v745
      %v1636 = vpop.permute.xlu0 %1635
      %1638 = vset.pattern.permute.xlu0 11
      %1639 = vperm.xlu0 %1638, %v750
      %v1640 = vpop.permute.xlu0 %1639
      %1642 = vset.pattern.permute.xlu0 11
      %1643 = vperm.xlu0 %1642, %v755
      %v1644 = vpop.permute.xlu0 %1643
      %1646 = vset.pattern.permute.xlu0 11
      %1647 = vperm.xlu0 %1646, %v760
      %v1648 = vpop.permute.xlu0 %1647
      %1650 = vset.pattern.permute.xlu0 11
      %1651 = vperm.xlu0 %1650, %v765
      %v1652 = vpop.permute.xlu0 %1651
      %1654 = vset.pattern.permute.xlu0 11
      %1655 = vperm.xlu0 %1654, %v770
      %v1656 = vpop.permute.xlu0 %1655
      %1658 = vset.pattern.permute.xlu0 11
      %1659 = vperm.xlu0 %1658, %v775
      %v1660 = vpop.permute.xlu0 %1659
      %v1662 = vmul.f32 %v1026, %v1632
      %v1663 = vmul.f32 %v1028, %v1636
      %v1664 = vmul.f32 %v1030, %v1640
      %v1665 = vmul.f32 %v1032, %v1644
      %v1666 = vmul.f32 %v1034, %v1648
      %v1667 = vmul.f32 %v1036, %v1652
      %v1668 = vmul.f32 %v1038, %v1656
      %v1669 = vmul.f32 %v1040, %v1660
      %v1670 = vsel %vm1065, %v1662, -inf
      %v1671 = vsel %vm1065, %v1663, -inf
      %v1672 = vsel %vm1065, %v1664, -inf
      %v1673 = vsel %vm1065, %v1665, -inf
      %v1674 = vsel %vm1065, %v1666, -inf
      %v1675 = vmax.f32 %v1670, %v1674
      %v1676 = vsel %vm1065, %v1667, -inf
      %v1677 = vmax.f32 %v1671, %v1676
      %v1678 = vsel %vm1065, %v1668, -inf
      %v1679 = vmax.f32 %v1672, %v1678
      %v1680 = vsel %vm1065, %v1669, -inf
      %v1681 = vmax.f32 %v1673, %v1680
      %v1682 = vmax.f32 %v1675, %v1677
      %v1683 = vmax.f32 %v1679, %v1681
      %v1684 = vmax.f32 %v1682, %v1683
      %v1685 = vrot.slane %v1684, 4
      %v1686 = vmax.f32 %v1684, %v1685
      %v1687 = vrot.slane %v1686, 2
      %v1688 = vmax.f32 %v1686, %v1687
      %v1689 = vrot.slane %v1688, 1
      %v1690 = vmax.f32 %v1688, %v1689
      %1691 = vset.pattern.permute.xlu0 12
      %1692 = vperm.xlu0 %1691, %v740
      %v1693 = vpop.permute.xlu0 %1692
      %1695 = vset.pattern.permute.xlu0 12
      %1696 = vperm.xlu0 %1695, %v745
      %v1697 = vpop.permute.xlu0 %1696
      %1699 = vset.pattern.permute.xlu0 12
      %1700 = vperm.xlu0 %1699, %v750
      %v1701 = vpop.permute.xlu0 %1700
      %1703 = vset.pattern.permute.xlu0 12
      %1704 = vperm.xlu0 %1703, %v755
      %v1705 = vpop.permute.xlu0 %1704
      %1707 = vset.pattern.permute.xlu0 12
      %1708 = vperm.xlu0 %1707, %v760
      %v1709 = vpop.permute.xlu0 %1708
      %1711 = vset.pattern.permute.xlu0 12
      %1712 = vperm.xlu0 %1711, %v765
      %v1713 = vpop.permute.xlu0 %1712
      %1715 = vset.pattern.permute.xlu0 12
      %1716 = vperm.xlu0 %1715, %v770
      %v1717 = vpop.permute.xlu0 %1716
      %1719 = vset.pattern.permute.xlu0 12
      %1720 = vperm.xlu0 %1719, %v775
      %v1721 = vpop.permute.xlu0 %1720
      %v1723 = vmul.f32 %v1026, %v1693
      %v1724 = vmul.f32 %v1028, %v1697
      %v1725 = vmul.f32 %v1030, %v1701
      %v1726 = vmul.f32 %v1032, %v1705
      %v1727 = vmul.f32 %v1034, %v1709
      %v1728 = vmul.f32 %v1036, %v1713
      %v1729 = vmul.f32 %v1038, %v1717
      %v1730 = vmul.f32 %v1040, %v1721
      %v1731 = vsel %vm1065, %v1723, -inf
      %v1732 = vsel %vm1065, %v1724, -inf
      %v1733 = vsel %vm1065, %v1725, -inf
      %v1734 = vsel %vm1065, %v1726, -inf
      %v1735 = vsel %vm1065, %v1727, -inf
      %v1736 = vmax.f32 %v1731, %v1735
      %v1737 = vsel %vm1065, %v1728, -inf
      %v1738 = vmax.f32 %v1732, %v1737
      %v1739 = vsel %vm1065, %v1729, -inf
      %v1740 = vmax.f32 %v1733, %v1739
      %v1741 = vsel %vm1065, %v1730, -inf
      %v1742 = vmax.f32 %v1734, %v1741
      %v1743 = vmax.f32 %v1736, %v1738
      %v1744 = vmax.f32 %v1740, %v1742
      %v1745 = vmax.f32 %v1743, %v1744
      %v1746 = vrot.slane %v1745, 4
      %v1747 = vmax.f32 %v1745, %v1746
      %v1748 = vrot.slane %v1747, 2
      %v1749 = vmax.f32 %v1747, %v1748
      %v1750 = vrot.slane %v1749, 1
      %v1751 = vmax.f32 %v1749, %v1750
      %1752 = vset.pattern.permute.xlu0 13
      %1753 = vperm.xlu0 %1752, %v740
      %v1754 = vpop.permute.xlu0 %1753
      %1756 = vset.pattern.permute.xlu0 13
      %1757 = vperm.xlu0 %1756, %v745
      %v1758 = vpop.permute.xlu0 %1757
      %1760 = vset.pattern.permute.xlu0 13
      %1761 = vperm.xlu0 %1760, %v750
      %v1762 = vpop.permute.xlu0 %1761
      %1764 = vset.pattern.permute.xlu0 13
      %1765 = vperm.xlu0 %1764, %v755
      %v1766 = vpop.permute.xlu0 %1765
      %1768 = vset.pattern.permute.xlu0 13
      %1769 = vperm.xlu0 %1768, %v760
      %v1770 = vpop.permute.xlu0 %1769
      %1772 = vset.pattern.permute.xlu0 13
      %1773 = vperm.xlu0 %1772, %v765
      %v1774 = vpop.permute.xlu0 %1773
      %1776 = vset.pattern.permute.xlu0 13
      %1777 = vperm.xlu0 %1776, %v770
      %v1778 = vpop.permute.xlu0 %1777
      %1780 = vset.pattern.permute.xlu0 13
      %1781 = vperm.xlu0 %1780, %v775
      %v1782 = vpop.permute.xlu0 %1781
      %v1784 = vmul.f32 %v1026, %v1754
      %v1785 = vmul.f32 %v1028, %v1758
      %v1786 = vmul.f32 %v1030, %v1762
      %v1787 = vmul.f32 %v1032, %v1766
      %v1788 = vmul.f32 %v1034, %v1770
      %v1789 = vmul.f32 %v1036, %v1774
      %v1790 = vmul.f32 %v1038, %v1778
      %v1791 = vmul.f32 %v1040, %v1782
      %v1792 = vsel %vm1065, %v1784, -inf
      %v1793 = vsel %vm1065, %v1785, -inf
      %v1794 = vsel %vm1065, %v1786, -inf
      %v1795 = vsel %vm1065, %v1787, -inf
      %v1796 = vsel %vm1065, %v1788, -inf
      %v1797 = vmax.f32 %v1792, %v1796
      %v1798 = vsel %vm1065, %v1789, -inf
      %v1799 = vmax.f32 %v1793, %v1798
      %v1800 = vsel %vm1065, %v1790, -inf
      %v1801 = vmax.f32 %v1794, %v1800
      %v1802 = vsel %vm1065, %v1791, -inf
      %v1803 = vmax.f32 %v1795, %v1802
      %v1804 = vmax.f32 %v1797, %v1799
      %v1805 = vmax.f32 %v1801, %v1803
      %v1806 = vmax.f32 %v1804, %v1805
      %v1807 = vrot.slane %v1806, 4
      %v1808 = vmax.f32 %v1806, %v1807
      %v1809 = vrot.slane %v1808, 2
      %v1810 = vmax.f32 %v1808, %v1809
      %v1811 = vrot.slane %v1810, 1
      %v1812 = vmax.f32 %v1810, %v1811
      %1813 = vset.pattern.permute.xlu0 14
      %1814 = vperm.xlu0 %1813, %v740
      %v1815 = vpop.permute.xlu0 %1814
      %1817 = vset.pattern.permute.xlu0 14
      %1818 = vperm.xlu0 %1817, %v745
      %v1819 = vpop.permute.xlu0 %1818
      %1821 = vset.pattern.permute.xlu0 14
      %1822 = vperm.xlu0 %1821, %v750
      %v1823 = vpop.permute.xlu0 %1822
      %1825 = vset.pattern.permute.xlu0 14
      %1826 = vperm.xlu0 %1825, %v755
      %v1827 = vpop.permute.xlu0 %1826
      %1829 = vset.pattern.permute.xlu0 14
      %1830 = vperm.xlu0 %1829, %v760
      %v1831 = vpop.permute.xlu0 %1830
      %1833 = vset.pattern.permute.xlu0 14
      %1834 = vperm.xlu0 %1833, %v765
      %v1835 = vpop.permute.xlu0 %1834
      %1837 = vset.pattern.permute.xlu0 14
      %1838 = vperm.xlu0 %1837, %v770
      %v1839 = vpop.permute.xlu0 %1838
      %1841 = vset.pattern.permute.xlu0 14
      %1842 = vperm.xlu0 %1841, %v775
      %v1843 = vpop.permute.xlu0 %1842
      %v1845 = vmul.f32 %v1026, %v1815
      %v1846 = vmul.f32 %v1028, %v1819
      %v1847 = vmul.f32 %v1030, %v1823
      %v1848 = vmul.f32 %v1032, %v1827
      %v1849 = vmul.f32 %v1034, %v1831
      %v1850 = vmul.f32 %v1036, %v1835
      %v1851 = vmul.f32 %v1038, %v1839
      %v1852 = vmul.f32 %v1040, %v1843
      %v1853 = vsel %vm1065, %v1845, -inf
      %v1854 = vsel %vm1065, %v1846, -inf
      %v1855 = vsel %vm1065, %v1847, -inf
      %v1856 = vsel %vm1065, %v1848, -inf
      %v1857 = vsel %vm1065, %v1849, -inf
      %v1858 = vmax.f32 %v1853, %v1857
      %v1859 = vsel %vm1065, %v1850, -inf
      %v1860 = vmax.f32 %v1854, %v1859
      %v1861 = vsel %vm1065, %v1851, -inf
      %v1862 = vmax.f32 %v1855, %v1861
      %v1863 = vsel %vm1065, %v1852, -inf
      %v1864 = vmax.f32 %v1856, %v1863
      %v1865 = vmax.f32 %v1858, %v1860
      %v1866 = vmax.f32 %v1862, %v1864
      %v1867 = vmax.f32 %v1865, %v1866
      %v1868 = vrot.slane %v1867, 4
      %v1869 = vmax.f32 %v1867, %v1868
      %v1870 = vrot.slane %v1869, 2
      %v1871 = vmax.f32 %v1869, %v1870
      %v1872 = vrot.slane %v1871, 1
      %v1873 = vmax.f32 %v1871, %v1872
      %1874 = vset.pattern.permute.xlu0 15
      %1875 = vperm.xlu0 %1874, %v740
      %v1876 = vpop.permute.xlu0 %1875
      %1878 = vset.pattern.permute.xlu0 15
      %1879 = vperm.xlu0 %1878, %v745
      %v1880 = vpop.permute.xlu0 %1879
      %1882 = vset.pattern.permute.xlu0 15
      %1883 = vperm.xlu0 %1882, %v750
      %v1884 = vpop.permute.xlu0 %1883
      %1886 = vset.pattern.permute.xlu0 15
      %1887 = vperm.xlu0 %1886, %v755
      %v1888 = vpop.permute.xlu0 %1887
      %1890 = vset.pattern.permute.xlu0 15
      %1891 = vperm.xlu0 %1890, %v760
      %v1892 = vpop.permute.xlu0 %1891
      %1894 = vset.pattern.permute.xlu0 15
      %1895 = vperm.xlu0 %1894, %v765
      %v1896 = vpop.permute.xlu0 %1895
      %1898 = vset.pattern.permute.xlu0 15
      %1899 = vperm.xlu0 %1898, %v770
      %v1900 = vpop.permute.xlu0 %1899
      %1902 = vset.pattern.permute.xlu0 15
      %1903 = vperm.xlu0 %1902, %v775
      %v1904 = vpop.permute.xlu0 %1903
      %v1906 = vmul.f32 %v1026, %v1876
      %v1907 = vmul.f32 %v1028, %v1880
      %v1908 = vmul.f32 %v1030, %v1884
      %v1909 = vmul.f32 %v1032, %v1888
      %v1910 = vmul.f32 %v1034, %v1892
      %v1911 = vmul.f32 %v1036, %v1896
      %v1912 = vmul.f32 %v1038, %v1900
      %v1913 = vmul.f32 %v1040, %v1904
      %v1914 = vsel %vm1065, %v1906, -inf
      %v1915 = vsel %vm1065, %v1907, -inf
      %v1916 = vsel %vm1065, %v1908, -inf
      %v1917 = vsel %vm1065, %v1909, -inf
      %v1918 = vsel %vm1065, %v1910, -inf
      %v1919 = vmax.f32 %v1914, %v1918
      %v1920 = vsel %vm1065, %v1911, -inf
      %v1921 = vmax.f32 %v1915, %v1920
      %v1922 = vsel %vm1065, %v1912, -inf
      %v1923 = vmax.f32 %v1916, %v1922
      %v1924 = vsel %vm1065, %v1913, -inf
      %v1925 = vmax.f32 %v1917, %v1924
      %v1926 = vmax.f32 %v1919, %v1921
      %v1927 = vmax.f32 %v1923, %v1925
      %v1928 = vmax.f32 %v1926, %v1927
      %v1929 = vrot.slane %v1928, 4
      %v1930 = vmax.f32 %v1928, %v1929
      %v1931 = vrot.slane %v1930, 2
      %v1932 = vmax.f32 %v1930, %v1931
      %v1933 = vrot.slane %v1932, 1
      %v1934 = vmax.f32 %v1932, %v1933
      %1935 = vset.pattern.permute.xlu0 16
      %1936 = vperm.xlu0 %1935, %v740
      %v1937 = vpop.permute.xlu0 %1936
      %1939 = vset.pattern.permute.xlu0 16
      %1940 = vperm.xlu0 %1939, %v745
      %v1941 = vpop.permute.xlu0 %1940
      %1943 = vset.pattern.permute.xlu0 16
      %1944 = vperm.xlu0 %1943, %v750
      %v1945 = vpop.permute.xlu0 %1944
      %1947 = vset.pattern.permute.xlu0 16
      %1948 = vperm.xlu0 %1947, %v755
      %v1949 = vpop.permute.xlu0 %1948
      %1951 = vset.pattern.permute.xlu0 16
      %1952 = vperm.xlu0 %1951, %v760
      %v1953 = vpop.permute.xlu0 %1952
      %1955 = vset.pattern.permute.xlu0 16
      %1956 = vperm.xlu0 %1955, %v765
      %v1957 = vpop.permute.xlu0 %1956
      %1959 = vset.pattern.permute.xlu0 16
      %1960 = vperm.xlu0 %1959, %v770
      %v1961 = vpop.permute.xlu0 %1960
      %1963 = vset.pattern.permute.xlu0 16
      %1964 = vperm.xlu0 %1963, %v775
      %v1965 = vpop.permute.xlu0 %1964
      %v1967 = vmul.f32 %v1026, %v1937
      %v1968 = vmul.f32 %v1028, %v1941
      %v1969 = vmul.f32 %v1030, %v1945
      %v1970 = vmul.f32 %v1032, %v1949
      %v1971 = vmul.f32 %v1034, %v1953
      %v1972 = vmul.f32 %v1036, %v1957
      %v1973 = vmul.f32 %v1038, %v1961
      %v1974 = vmul.f32 %v1040, %v1965
      %v1975 = vsel %vm1065, %v1967, -inf
      %v1976 = vsel %vm1065, %v1968, -inf
      %v1977 = vsel %vm1065, %v1969, -inf
      %v1978 = vsel %vm1065, %v1970, -inf
      %v1979 = vsel %vm1065, %v1971, -inf
      %v1980 = vmax.f32 %v1975, %v1979
      %v1981 = vsel %vm1065, %v1972, -inf
      %v1982 = vmax.f32 %v1976, %v1981
      %v1983 = vsel %vm1065, %v1973, -inf
      %v1984 = vmax.f32 %v1977, %v1983
      %v1985 = vsel %vm1065, %v1974, -inf
      %v1986 = vmax.f32 %v1978, %v1985
      %v1987 = vmax.f32 %v1980, %v1982
      %v1988 = vmax.f32 %v1984, %v1986
      %v1989 = vmax.f32 %v1987, %v1988
      %v1990 = vrot.slane %v1989, 4
      %v1991 = vmax.f32 %v1989, %v1990
      %v1992 = vrot.slane %v1991, 2
      %v1993 = vmax.f32 %v1991, %v1992
      %v1994 = vrot.slane %v1993, 1
      %v1995 = vmax.f32 %v1993, %v1994
      %1996 = vset.pattern.permute.xlu0 17
      %1997 = vperm.xlu0 %1996, %v740
      %v1998 = vpop.permute.xlu0 %1997
      %2000 = vset.pattern.permute.xlu0 17
      %2001 = vperm.xlu0 %2000, %v745
      %v2002 = vpop.permute.xlu0 %2001
      %2004 = vset.pattern.permute.xlu0 17
      %2005 = vperm.xlu0 %2004, %v750
      %v2006 = vpop.permute.xlu0 %2005
      %2008 = vset.pattern.permute.xlu0 17
      %2009 = vperm.xlu0 %2008, %v755
      %v2010 = vpop.permute.xlu0 %2009
      %2012 = vset.pattern.permute.xlu0 17
      %2013 = vperm.xlu0 %2012, %v760
      %v2014 = vpop.permute.xlu0 %2013
      %2016 = vset.pattern.permute.xlu0 17
      %2017 = vperm.xlu0 %2016, %v765
      %v2018 = vpop.permute.xlu0 %2017
      %2020 = vset.pattern.permute.xlu0 17
      %2021 = vperm.xlu0 %2020, %v770
      %v2022 = vpop.permute.xlu0 %2021
      %2024 = vset.pattern.permute.xlu0 17
      %2025 = vperm.xlu0 %2024, %v775
      %v2026 = vpop.permute.xlu0 %2025
      %v2028 = vmul.f32 %v1026, %v1998
      %v2029 = vmul.f32 %v1028, %v2002
      %v2030 = vmul.f32 %v1030, %v2006
      %v2031 = vmul.f32 %v1032, %v2010
      %v2032 = vmul.f32 %v1034, %v2014
      %v2033 = vmul.f32 %v1036, %v2018
      %v2034 = vmul.f32 %v1038, %v2022
      %v2035 = vmul.f32 %v1040, %v2026
      %v2036 = vsel %vm1065, %v2028, -inf
      %v2037 = vsel %vm1065, %v2029, -inf
      %v2038 = vsel %vm1065, %v2030, -inf
      %v2039 = vsel %vm1065, %v2031, -inf
      %v2040 = vsel %vm1065, %v2032, -inf
      %v2041 = vmax.f32 %v2036, %v2040
      %v2042 = vsel %vm1065, %v2033, -inf
      %v2043 = vmax.f32 %v2037, %v2042
      %v2044 = vsel %vm1065, %v2034, -inf
      %v2045 = vmax.f32 %v2038, %v2044
      %v2046 = vsel %vm1065, %v2035, -inf
      %v2047 = vmax.f32 %v2039, %v2046
      %v2048 = vmax.f32 %v2041, %v2043
      %v2049 = vmax.f32 %v2045, %v2047
      %v2050 = vmax.f32 %v2048, %v2049
      %v2051 = vrot.slane %v2050, 4
      %v2052 = vmax.f32 %v2050, %v2051
      %v2053 = vrot.slane %v2052, 2
      %v2054 = vmax.f32 %v2052, %v2053
      %v2055 = vrot.slane %v2054, 1
      %v2056 = vmax.f32 %v2054, %v2055
      %2057 = vset.pattern.permute.xlu0 18
      %2058 = vperm.xlu0 %2057, %v740
      %v2059 = vpop.permute.xlu0 %2058
      %2061 = vset.pattern.permute.xlu0 18
      %2062 = vperm.xlu0 %2061, %v745
      %v2063 = vpop.permute.xlu0 %2062
      %2065 = vset.pattern.permute.xlu0 18
      %2066 = vperm.xlu0 %2065, %v750
      %v2067 = vpop.permute.xlu0 %2066
      %2069 = vset.pattern.permute.xlu0 18
      %2070 = vperm.xlu0 %2069, %v755
      %v2071 = vpop.permute.xlu0 %2070
      %2073 = vset.pattern.permute.xlu0 18
      %2074 = vperm.xlu0 %2073, %v760
      %v2075 = vpop.permute.xlu0 %2074
      %2077 = vset.pattern.permute.xlu0 18
      %2078 = vperm.xlu0 %2077, %v765
      %v2079 = vpop.permute.xlu0 %2078
      %2081 = vset.pattern.permute.xlu0 18
      %2082 = vperm.xlu0 %2081, %v770
      %v2083 = vpop.permute.xlu0 %2082
      %2085 = vset.pattern.permute.xlu0 18
      %2086 = vperm.xlu0 %2085, %v775
      %v2087 = vpop.permute.xlu0 %2086
      %v2089 = vmul.f32 %v1026, %v2059
      %v2090 = vmul.f32 %v1028, %v2063
      %v2091 = vmul.f32 %v1030, %v2067
      %v2092 = vmul.f32 %v1032, %v2071
      %v2093 = vmul.f32 %v1034, %v2075
      %v2094 = vmul.f32 %v1036, %v2079
      %v2095 = vmul.f32 %v1038, %v2083
      %v2096 = vmul.f32 %v1040, %v2087
      %v2097 = vsel %vm1065, %v2089, -inf
      %v2098 = vsel %vm1065, %v2090, -inf
      %v2099 = vsel %vm1065, %v2091, -inf
      %v2100 = vsel %vm1065, %v2092, -inf
      %v2101 = vsel %vm1065, %v2093, -inf
      %v2102 = vmax.f32 %v2097, %v2101
      %v2103 = vsel %vm1065, %v2094, -inf
      %v2104 = vmax.f32 %v2098, %v2103
      %v2105 = vsel %vm1065, %v2095, -inf
      %v2106 = vmax.f32 %v2099, %v2105
      %v2107 = vsel %vm1065, %v2096, -inf
      %v2108 = vmax.f32 %v2100, %v2107
      %v2109 = vmax.f32 %v2102, %v2104
      %v2110 = vmax.f32 %v2106, %v2108
      %v2111 = vmax.f32 %v2109, %v2110
      %v2112 = vrot.slane %v2111, 4
      %v2113 = vmax.f32 %v2111, %v2112
      %v2114 = vrot.slane %v2113, 2
      %v2115 = vmax.f32 %v2113, %v2114
      %v2116 = vrot.slane %v2115, 1
      %v2117 = vmax.f32 %v2115, %v2116
      %2118 = vset.pattern.permute.xlu0 19
      %2119 = vperm.xlu0 %2118, %v740
      %v2120 = vpop.permute.xlu0 %2119
      %2122 = vset.pattern.permute.xlu0 19
      %2123 = vperm.xlu0 %2122, %v745
      %v2124 = vpop.permute.xlu0 %2123
      %2126 = vset.pattern.permute.xlu0 19
      %2127 = vperm.xlu0 %2126, %v750
      %v2128 = vpop.permute.xlu0 %2127
      %2130 = vset.pattern.permute.xlu0 19
      %2131 = vperm.xlu0 %2130, %v755
      %v2132 = vpop.permute.xlu0 %2131
      %2134 = vset.pattern.permute.xlu0 19
      %2135 = vperm.xlu0 %2134, %v760
      %v2136 = vpop.permute.xlu0 %2135
      %2138 = vset.pattern.permute.xlu0 19
      %2139 = vperm.xlu0 %2138, %v765
      %v2140 = vpop.permute.xlu0 %2139
      %2142 = vset.pattern.permute.xlu0 19
      %2143 = vperm.xlu0 %2142, %v770
      %v2144 = vpop.permute.xlu0 %2143
      %2146 = vset.pattern.permute.xlu0 19
      %2147 = vperm.xlu0 %2146, %v775
      %v2148 = vpop.permute.xlu0 %2147
      %v2150 = vmul.f32 %v1026, %v2120
      %v2151 = vmul.f32 %v1028, %v2124
      %v2152 = vmul.f32 %v1030, %v2128
      %v2153 = vmul.f32 %v1032, %v2132
      %v2154 = vmul.f32 %v1034, %v2136
      %v2155 = vmul.f32 %v1036, %v2140
      %v2156 = vmul.f32 %v1038, %v2144
      %v2157 = vmul.f32 %v1040, %v2148
      %v2158 = vsel %vm1065, %v2150, -inf
      %v2159 = vsel %vm1065, %v2151, -inf
      %v2160 = vsel %vm1065, %v2152, -inf
      %v2161 = vsel %vm1065, %v2153, -inf
      %v2162 = vsel %vm1065, %v2154, -inf
      %v2163 = vmax.f32 %v2158, %v2162
      %v2164 = vsel %vm1065, %v2155, -inf
      %v2165 = vmax.f32 %v2159, %v2164
      %v2166 = vsel %vm1065, %v2156, -inf
      %v2167 = vmax.f32 %v2160, %v2166
      %v2168 = vsel %vm1065, %v2157, -inf
      %v2169 = vmax.f32 %v2161, %v2168
      %v2170 = vmax.f32 %v2163, %v2165
      %v2171 = vmax.f32 %v2167, %v2169
      %v2172 = vmax.f32 %v2170, %v2171
      %v2173 = vrot.slane %v2172, 4
      %v2174 = vmax.f32 %v2172, %v2173
      %v2175 = vrot.slane %v2174, 2
      %v2176 = vmax.f32 %v2174, %v2175
      %v2177 = vrot.slane %v2176, 1
      %v2178 = vmax.f32 %v2176, %v2177
      %vm2179 = vcmask 1040384
      %v2180 = vsel %vm2179, %v1263, %v1324
      %vm2181 = vcmask 1041408
      %v2182 = vsel %vm2181, %v2180, %v1385
      %vm2183 = vcmask 1042432
      %v2184 = vsel %vm2183, %v2182, %v1446
      %v2185 = vsel %vm835, %v2184, %v1507
      %vm2186 = vcmask 1044480
      %v2187 = vsel %vm2186, %v2185, %v1568
      %vm2188 = vcmask 1045504
      %v2189 = vsel %vm2188, %v2187, %v1629
      %vm2190 = vcmask 1046528
      %v2191 = vsel %vm2190, %v2189, %v1690
      %v2192 = vsel %vm2179, %v1751, %v1812
      %v2193 = vsel %vm2181, %v2192, %v1873
      %v2194 = vsel %vm2183, %v2193, %v1934
      %v2195 = vsel %vm835, %v2194, %v1995
      %v2196 = vsel %vm2186, %v2195, %v2056
      %v2197 = vsel %vm2188, %v2196, %v2117
      %v2198 = vsel %vm2190, %v2197, %v2178
      %2199 = vxpose.xlu0.b32.start [1/16] %v2191, 128
      %2200 = vxpose.xlu0.b32.cont [2/16] %v2198, 128
      %2201 = vxpose.xlu0.b32.cont [3/16] 0.0, 128
      %2202 = vxpose.xlu0.b32.cont [4/16] 0.0, 128
      %2203 = vxpose.xlu0.b32.cont [5/16] 0.0, 128
      %2204 = vxpose.xlu0.b32.cont [6/16] 0.0, 128
      %2205 = vxpose.xlu0.b32.cont [7/16] 0.0, 128
      %2206 = vxpose.xlu0.b32.cont [8/16] 0.0, 128
      %2207 = vxpose.xlu0.b32.cont [9/16] 0.0, 128
      %2208 = vxpose.xlu0.b32.cont [10/16] 0.0, 128
      %2209 = vxpose.xlu0.b32.cont [11/16] 0.0, 128
      %2210 = vxpose.xlu0.b32.cont [12/16] 0.0, 128
      %2211 = vxpose.xlu0.b32.cont [13/16] 0.0, 128
      %2212 = vxpose.xlu0.b32.cont [14/16] 0.0, 128
      %2213 = vxpose.xlu0.b32.cont [15/16] 0.0, 128
      %2214 = vxpose.xlu0.b32.end [16/16] 0.0, 128
      %v2215 = vpop.trf.xlu0
      %v2216 = vpop.trf.xlu0
      %v2217 = vpop.trf.xlu0
      %v2218 = vpop.trf.xlu0
      %v2219 = vpop.trf.xlu0
      %v2220 = vpop.trf.xlu0
      %v2221 = vpop.trf.xlu0
      %v2222 = vpop.trf.xlu0
      %v2223 = vpop.trf.xlu0
      %v2224 = vpop.trf.xlu0
      %v2225 = vpop.trf.xlu0
      %v2226 = vpop.trf.xlu0
      %v2227 = vpop.trf.xlu0
      %v2228 = vpop.trf.xlu0
      %v2229 = vpop.trf.xlu0
      %v2230 = vpop.trf.xlu0
      %v2231 = vld [vmem:[%s6] sm:$0xff]
      %v2232 = vld [vmem:[%s6 + $0x8] sm:$0xff]
      %v2233 = vld [vmem:[%s6 + $0x10] sm:$0xff]
      %v2234 = vld [vmem:[%s6 + $0x18] sm:$0xff]
      %v2235 = vld [vmem:[%s7] sm:$0xff]
      %v2236 = vld [vmem:[%s7 + $0x8] sm:$0xff]
      %v2238 = vsel %vm467, %v1195, 0
      %v2241 = vsel %vm467, %v1196, 0
      %v2244 = vsel %vm467, %v1197, 0
      %v2247 = vsel %vm467, %v1198, 0
      %v2250 = vsel %vm467, %v1199, 0
      %v2253 = vsel %vm467, %v1200, 0
      %v2256 = vsel %vm467, %v1201, 0
      %v2259 = vsel %vm467, %v1202, 0
      %2261 = vmatprep.subr.mxu0 0.0
      %2262 = vmatpush1.msra.mxu0 %v2235
      %2263 = vmatprep.subr.mxu0 0.0
      %2264 = vmatpush1.msra.mxu0 %v2236
      %2265 = vmatprep.subr.mxu0 0.0
      %2266 = vmatpush1.msra.mxu0 0.0
      %2267 = vmatprep.subr.mxu0 0.0
      %2268 = vmatpush1.msra.mxu0 0.0
      %2269 = vmatprep.subr.mxu0 0.0
      %2270 = vmatpush1.msra.mxu0 0.0
      %2271 = vmatprep.subr.mxu0 0.0
      %2272 = vmatpush1.msra.mxu0 0.0
      %2273 = vmatprep.subr.mxu0 0.0
      %2274 = vmatpush1.msra.mxu0 0.0
      %2275 = vmatprep.subr.mxu0 0.0
      %2276 = vmatpush1.msra.mxu0 0.0
      %2277 = vmatprep.subr.mxu0 0.0
      %2278 = vmatpush1.msra.mxu0 0.0
      %2279 = vmatprep.subr.mxu0 0.0
      %2280 = vmatpush1.msra.mxu0 0.0
      %2281 = vmatprep.subr.mxu0 0.0
      %2282 = vmatpush1.msra.mxu0 0.0
      %2283 = vmatprep.subr.mxu0 0.0
      %2284 = vmatpush1.msra.mxu0 0.0
      %2285 = vmatprep.subr.mxu0 0.0
      %2286 = vmatpush1.msra.mxu0 0.0
      %2287 = vmatprep.subr.mxu0 0.0
      %2288 = vmatpush1.msra.mxu0 0.0
      %2289 = vmatprep.subr.mxu0 0.0
      %2290 = vmatpush1.msra.mxu0 0.0
      %2291 = vmatprep.subr.mxu0 0.0
      %2292 = vmatpush1.msra.mxu0 0.0
      %2293 = vmatprep.subr.mxu0 0.0
      %2294 = vmatpush1.msra.mxu0 0.0
      %2295 = vmatprep.subr.mxu0 0.0
      %2296 = vmatpush1.msra.mxu0 0.0
      %2297 = vmatprep.subr.mxu0 0.0
      %2298 = vmatpush1.msra.mxu0 0.0
      %2299 = vmatprep.subr.mxu0 0.0
      %2300 = vmatpush1.msra.mxu0 0.0
      %2301 = vmatprep.subr.mxu0 0.0
      %2302 = vmatpush1.msra.mxu0 0.0
      %2303 = vmatprep.subr.mxu0 0.0
      %2304 = vmatpush1.msra.mxu0 0.0
      %2305 = vmatprep.subr.mxu0 0.0
      %2306 = vmatpush1.msra.mxu0 0.0
      %2307 = vmatprep.subr.mxu0 0.0
      %2308 = vmatpush1.msra.mxu0 0.0
      %2309 = vmatprep.subr.mxu0 0.0
      %2310 = vmatpush1.msra.mxu0 0.0
      %2311 = vmatprep.subr.mxu0 0.0
      %2312 = vmatpush1.msra.mxu0 0.0
      %2313 = vmatprep.subr.mxu0 0.0
      %2314 = vmatpush1.msra.mxu0 0.0
      %2315 = vmatprep.subr.mxu0 0.0
      %2316 = vmatpush1.msra.mxu0 0.0
      %2317 = vmatprep.subr.mxu0 0.0
      %2318 = vmatpush1.msra.mxu0 0.0
      %2319 = vmatprep.subr.mxu0 0.0
      %2320 = vmatpush1.msra.mxu0 0.0
      %2321 = vmatprep.subr.mxu0 0.0
      %2322 = vmatpush1.msra.mxu0 0.0
      %2323 = vmatprep.subr.mxu0 0.0
      %2324 = vmatpush1.msra.mxu0 0.0
      %2325 = vmatprep.mubr.f32.mxu0 0.0
      %2326 = vmatmul.mubr.f32.gmra.mrb[0].mxu0 %v2238
      %v2327 = vpop.f32.mrb[0].mxu0
      %v2328 = vadd.f32 0.0, %v2327
      %v2329 = vpop.f32.mrb[0].mxu0
      %2330 = vmatprep.mubr.f32.mxu0 0.0
      %2331 = vmatmul.mubr.f32.gmra.mrb[0].mxu0 %v2241
      %v2332 = vpop.f32.mrb[0].mxu0
      %v2333 = vadd.f32 0.0, %v2332
      %v2334 = vpop.f32.mrb[0].mxu0
      %2335 = vmatprep.mubr.f32.mxu0 0.0
      %2336 = vmatmul.mubr.f32.gmra.mrb[0].mxu0 %v2244
      %v2337 = vpop.f32.mrb[0].mxu0
      %v2338 = vadd.f32 0.0, %v2337
      %v2339 = vpop.f32.mrb[0].mxu0
      %2340 = vmatprep.mubr.f32.mxu0 0.0
      %2341 = vmatmul.mubr.f32.gmra.mrb[0].mxu0 %v2247
      %v2342 = vpop.f32.mrb[0].mxu0
      %v2343 = vadd.f32 0.0, %v2342
      %v2344 = vpop.f32.mrb[0].mxu0
      %2345 = vmatprep.mubr.f32.mxu0 0.0
      %2346 = vmatmul.mubr.f32.gmra.mrb[0].mxu0 %v2250
      %v2347 = vpop.f32.mrb[0].mxu0
      %v2348 = vadd.f32 0.0, %v2347
      %v2349 = vpop.f32.mrb[0].mxu0
      %2350 = vmatprep.mubr.f32.mxu0 0.0
      %2351 = vmatmul.mubr.f32.gmra.mrb[0].mxu0 %v2253
      %v2352 = vpop.f32.mrb[0].mxu0
      %v2353 = vadd.f32 0.0, %v2352
      %v2354 = vpop.f32.mrb[0].mxu0
      %2355 = vmatprep.mubr.f32.mxu0 0.0
      %2356 = vmatmul.mubr.f32.gmra.mrb[0].mxu0 %v2256
      %v2357 = vpop.f32.mrb[0].mxu0
      %v2358 = vadd.f32 0.0, %v2357
      %v2359 = vpop.f32.mrb[0].mxu0
      %2360 = vmatprep.mubr.f32.mxu0 0.0
      %2361 = vmatmul.mubr.f32.gmra.mrb[0].mxu0 %v2259
      %v2362 = vpop.f32.mrb[0].mxu0
      %v2363 = vadd.f32 0.0, %v2362
      %v2364 = vpop.f32.mrb[0].mxu0
      %2365 = vdwg.mxu0
      %2366 = vmatprep.subr.mxu0 0.0
      %2367 = vmatpush1.msra.mxu0 %v2231
      %2368 = vmatprep.subr.mxu0 0.0
      %2369 = vmatpush1.msra.mxu0 %v2232
      %2370 = vmatprep.subr.mxu0 0.0
      %2371 = vmatpush1.msra.mxu0 %v2233
      %2372 = vmatprep.subr.mxu0 0.0
      %2373 = vmatpush1.msra.mxu0 %v2234
      %2374 = vmatprep.subr.mxu0 0.0
      %2375 = vmatpush1.msra.mxu0 0.0
      %2376 = vmatprep.subr.mxu0 0.0
      %2377 = vmatpush1.msra.mxu0 0.0
      %2378 = vmatprep.subr.mxu0 0.0
      %2379 = vmatpush1.msra.mxu0 0.0
      %2380 = vmatprep.subr.mxu0 0.0
      %2381 = vmatpush1.msra.mxu0 0.0
      %2382 = vmatprep.subr.mxu0 0.0
      %2383 = vmatpush1.msra.mxu0 0.0
      %2384 = vmatprep.subr.mxu0 0.0
      %2385 = vmatpush1.msra.mxu0 0.0
      %2386 = vmatprep.subr.mxu0 0.0
      %2387 = vmatpush1.msra.mxu0 0.0
      %2388 = vmatprep.subr.mxu0 0.0
      %2389 = vmatpush1.msra.mxu0 0.0
      %2390 = vmatprep.subr.mxu0 0.0
      %2391 = vmatpush1.msra.mxu0 0.0
      %2392 = vmatprep.subr.mxu0 0.0
      %2393 = vmatpush1.msra.mxu0 0.0
      %2394 = vmatprep.subr.mxu0 0.0
      %2395 = vmatpush1.msra.mxu0 0.0
      %2396 = vmatprep.subr.mxu0 0.0
      %2397 = vmatpush1.msra.mxu0 0.0
      %2398 = vmatprep.subr.mxu0 0.0
      %2399 = vmatpush1.msra.mxu0 0.0
      %2400 = vmatprep.subr.mxu0 0.0
      %2401 = vmatpush1.msra.mxu0 0.0
      %2402 = vmatprep.subr.mxu0 0.0
      %2403 = vmatpush1.msra.mxu0 0.0
      %2404 = vmatprep.subr.mxu0 0.0
      %2405 = vmatpush1.msra.mxu0 0.0
      %2406 = vmatprep.subr.mxu0 0.0
      %2407 = vmatpush1.msra.mxu0 0.0
      %2408 = vmatprep.subr.mxu0 0.0
      %2409 = vmatpush1.msra.mxu0 0.0
      %2410 = vmatprep.subr.mxu0 0.0
      %2411 = vmatpush1.msra.mxu0 0.0
      %2412 = vmatprep.subr.mxu0 0.0
      %2413 = vmatpush1.msra.mxu0 0.0
      %2414 = vmatprep.subr.mxu0 0.0
      %2415 = vmatpush1.msra.mxu0 0.0
      %2416 = vmatprep.subr.mxu0 0.0
      %2417 = vmatpush1.msra.mxu0 0.0
      %2418 = vmatprep.subr.mxu0 0.0
      %2419 = vmatpush1.msra.mxu0 0.0
      %2420 = vmatprep.subr.mxu0 0.0
      %2421 = vmatpush1.msra.mxu0 0.0
      %2422 = vmatprep.subr.mxu0 0.0
      %2423 = vmatpush1.msra.mxu0 0.0
      %2424 = vmatprep.subr.mxu0 0.0
      %2425 = vmatpush1.msra.mxu0 0.0
      %2426 = vmatprep.subr.mxu0 0.0
      %2427 = vmatpush1.msra.mxu0 0.0
      %2428 = vmatprep.subr.mxu0 0.0
      %2429 = vmatpush1.msra.mxu0 0.0
      %2430 = vmatprep.mubr.f32.mxu0 0.0
      %2431 = vmatmul.mubr.f32.gmra.mrb[0].mxu0 %v650
      %v2432 = vpop.f32.mrb[0].mxu0
      %v2433 = vadd.f32 %v2328, %v2432
      %v2434 = vpop.f32.mrb[0].mxu0
      %2435 = vmatprep.mubr.f32.mxu0 0.0
      %2436 = vmatmul.mubr.f32.gmra.mrb[0].mxu0 %v653
      %v2437 = vpop.f32.mrb[0].mxu0
      %v2438 = vadd.f32 %v2333, %v2437
      %v2439 = vpop.f32.mrb[0].mxu0
      %2440 = vmatprep.mubr.f32.mxu0 0.0
      %2441 = vmatmul.mubr.f32.gmra.mrb[0].mxu0 %v656
      %v2442 = vpop.f32.mrb[0].mxu0
      %v2443 = vadd.f32 %v2338, %v2442
      %v2444 = vpop.f32.mrb[0].mxu0
      %2445 = vmatprep.mubr.f32.mxu0 0.0
      %2446 = vmatmul.mubr.f32.gmra.mrb[0].mxu0 %v659
      %v2447 = vpop.f32.mrb[0].mxu0
      %v2448 = vadd.f32 %v2343, %v2447
      %v2449 = vpop.f32.mrb[0].mxu0
      %2450 = vmatprep.mubr.f32.mxu0 0.0
      %2451 = vmatmul.mubr.f32.gmra.mrb[0].mxu0 %v662
      %v2452 = vpop.f32.mrb[0].mxu0
      %v2453 = vadd.f32 %v2348, %v2452
      %v2454 = vpop.f32.mrb[0].mxu0
      %2455 = vmatprep.mubr.f32.mxu0 0.0
      %2456 = vmatmul.mubr.f32.gmra.mrb[0].mxu0 %v665
      %v2457 = vpop.f32.mrb[0].mxu0
      %v2458 = vadd.f32 %v2353, %v2457
      %v2459 = vpop.f32.mrb[0].mxu0
      %2460 = vmatprep.mubr.f32.mxu0 0.0
      %2461 = vmatmul.mubr.f32.gmra.mrb[0].mxu0 %v668
      %v2462 = vpop.f32.mrb[0].mxu0
      %v2463 = vadd.f32 %v2358, %v2462
      %v2464 = vpop.f32.mrb[0].mxu0
      %2465 = vmatprep.mubr.f32.mxu0 0.0
      %2466 = vmatmul.mubr.f32.gmra.mrb[0].mxu0 %v671
      %v2467 = vpop.f32.mrb[0].mxu0
      %v2468 = vadd.f32 %v2363, %v2467
      %v2469 = vpop.f32.mrb[0].mxu0
      %2470 = vdwg.mxu0
      %v2471 = vld [vmem:[%s8] sm:$0xff]
      %v2472 = vld [vmem:[%s8 + $0x8] sm:$0xff]
      %v2474 = vsel %vm467, %v2215, 0
      %v2477 = vsel %vm467, %v2216, 0
      %v2480 = vsel %vm467, %v2217, 0
      %v2483 = vsel %vm467, %v2218, 0
      %v2486 = vsel %vm467, %v2219, 0
      %v2489 = vsel %vm467, %v2220, 0
      %v2492 = vsel %vm467, %v2221, 0
      %v2495 = vsel %vm467, %v2222, 0
      %2497 = vmatprep.subr.mxu0 0.0
      %2498 = vmatpush1.msra.mxu0 %v2471
      %2499 = vmatprep.subr.mxu0 0.0
      %2500 = vmatpush1.msra.mxu0 %v2472
      %2501 = vmatprep.subr.mxu0 0.0
      %2502 = vmatpush1.msra.mxu0 0.0
      %2503 = vmatprep.subr.mxu0 0.0
      %2504 = vmatpush1.msra.mxu0 0.0
      %2505 = vmatprep.subr.mxu0 0.0
      %2506 = vmatpush1.msra.mxu0 0.0
      %2507 = vmatprep.subr.mxu0 0.0
      %2508 = vmatpush1.msra.mxu0 0.0
      %2509 = vmatprep.subr.mxu0 0.0
      %2510 = vmatpush1.msra.mxu0 0.0
      %2511 = vmatprep.subr.mxu0 0.0
      %2512 = vmatpush1.msra.mxu0 0.0
      %2513 = vmatprep.subr.mxu0 0.0
      %2514 = vmatpush1.msra.mxu0 0.0
      %2515 = vmatprep.subr.mxu0 0.0
      %2516 = vmatpush1.msra.mxu0 0.0
      %2517 = vmatprep.subr.mxu0 0.0
      %2518 = vmatpush1.msra.mxu0 0.0
      %2519 = vmatprep.subr.mxu0 0.0
      %2520 = vmatpush1.msra.mxu0 0.0
      %2521 = vmatprep.subr.mxu0 0.0
      %2522 = vmatpush1.msra.mxu0 0.0
      %2523 = vmatprep.subr.mxu0 0.0
      %2524 = vmatpush1.msra.mxu0 0.0
      %2525 = vmatprep.subr.mxu0 0.0
      %2526 = vmatpush1.msra.mxu0 0.0
      %2527 = vmatprep.subr.mxu0 0.0
      %2528 = vmatpush1.msra.mxu0 0.0
      %2529 = vmatprep.subr.mxu0 0.0
      %2530 = vmatpush1.msra.mxu0 0.0
      %2531 = vmatprep.subr.mxu0 0.0
      %2532 = vmatpush1.msra.mxu0 0.0
      %2533 = vmatprep.subr.mxu0 0.0
      %2534 = vmatpush1.msra.mxu0 0.0
      %2535 = vmatprep.subr.mxu0 0.0
      %2536 = vmatpush1.msra.mxu0 0.0
      %2537 = vmatprep.subr.mxu0 0.0
      %2538 = vmatpush1.msra.mxu0 0.0
      %2539 = vmatprep.subr.mxu0 0.0
      %2540 = vmatpush1.msra.mxu0 0.0
      %2541 = vmatprep.subr.mxu0 0.0
      %2542 = vmatpush1.msra.mxu0 0.0
      %2543 = vmatprep.subr.mxu0 0.0
      %2544 = vmatpush1.msra.mxu0 0.0
      %2545 = vmatprep.subr.mxu0 0.0
      %2546 = vmatpush1.msra.mxu0 0.0
      %2547 = vmatprep.subr.mxu0 0.0
      %2548 = vmatpush1.msra.mxu0 0.0
      %2549 = vmatprep.subr.mxu0 0.0
      %2550 = vmatpush1.msra.mxu0 0.0
      %2551 = vmatprep.subr.mxu0 0.0
      %2552 = vmatpush1.msra.mxu0 0.0
      %2553 = vmatprep.subr.mxu0 0.0
      %2554 = vmatpush1.msra.mxu0 0.0
      %2555 = vmatprep.subr.mxu0 0.0
      %2556 = vmatpush1.msra.mxu0 0.0
      %2557 = vmatprep.subr.mxu0 0.0
      %2558 = vmatpush1.msra.mxu0 0.0
      %2559 = vmatprep.subr.mxu0 0.0
      %2560 = vmatpush1.msra.mxu0 0.0
      %2561 = vmatprep.mubr.f32.mxu0 0.0
      %2562 = vmatmul.mubr.f32.gmra.mrb[0].mxu0 %v2474
      %v2563 = vpop.f32.mrb[0].mxu0
      %v2564 = vadd.f32 0.0, %v2563
      %v2565 = vpop.f32.mrb[0].mxu0
      %2566 = vmatprep.mubr.f32.mxu0 0.0
      %2567 = vmatmul.mubr.f32.gmra.mrb[0].mxu0 %v2477
      %v2568 = vpop.f32.mrb[0].mxu0
      %v2569 = vadd.f32 0.0, %v2568
      %v2570 = vpop.f32.mrb[0].mxu0
      %2571 = vmatprep.mubr.f32.mxu0 0.0
      %2572 = vmatmul.mubr.f32.gmra.mrb[0].mxu0 %v2480
      %v2573 = vpop.f32.mrb[0].mxu0
      %v2574 = vadd.f32 0.0, %v2573
      %v2575 = vpop.f32.mrb[0].mxu0
      %2576 = vmatprep.mubr.f32.mxu0 0.0
      %2577 = vmatmul.mubr.f32.gmra.mrb[0].mxu0 %v2483
      %v2578 = vpop.f32.mrb[0].mxu0
      %v2579 = vadd.f32 0.0, %v2578
      %v2580 = vpop.f32.mrb[0].mxu0
      %2581 = vmatprep.mubr.f32.mxu0 0.0
      %2582 = vmatmul.mubr.f32.gmra.mrb[0].mxu0 %v2486
      %v2583 = vpop.f32.mrb[0].mxu0
      %v2584 = vadd.f32 0.0, %v2583
      %v2585 = vpop.f32.mrb[0].mxu0
      %2586 = vmatprep.mubr.f32.mxu0 0.0
      %2587 = vmatmul.mubr.f32.gmra.mrb[0].mxu0 %v2489
      %v2588 = vpop.f32.mrb[0].mxu0
      %v2589 = vadd.f32 0.0, %v2588
      %v2590 = vpop.f32.mrb[0].mxu0
      %2591 = vmatprep.mubr.f32.mxu0 0.0
      %2592 = vmatmul.mubr.f32.gmra.mrb[0].mxu0 %v2492
      %v2593 = vpop.f32.mrb[0].mxu0
      %v2594 = vadd.f32 0.0, %v2593
      %v2595 = vpop.f32.mrb[0].mxu0
      %2596 = vmatprep.mubr.f32.mxu0 0.0
      %2597 = vmatmul.mubr.f32.gmra.mrb[0].mxu0 %v2495
      %v2598 = vpop.f32.mrb[0].mxu0
      %v2599 = vadd.f32 0.0, %v2598
      %v2600 = vpop.f32.mrb[0].mxu0
      %2601 = vdwg.mxu0
      %v2602 = vadd.f32 %v2433, %v2564
      %v2603 = vadd.f32 %v2438, %v2569
      %v2604 = vadd.f32 %v2443, %v2574
      %v2605 = vadd.f32 %v2448, %v2579
      %v2606 = vadd.f32 %v2453, %v2584
      %v2607 = vadd.f32 %v2458, %v2589
      %v2608 = vadd.f32 %v2463, %v2594
      %v2609 = vadd.f32 %v2468, %v2599
      %v2610 = vld [vmem:[%s9] sm:$0x1]
      %v2612 = vlaneseq
      %v2613 = vshrl.u32 %v2612, 7
      %v2614 = vsub.s32 0, %v2613
      %v2615 = vrot.slane %v2610, %v2614
      %v2617 = vadd.f32 %v2602, %v2615
      %v2618 = vadd.f32 %v2603, %v2615
      %v2619 = vadd.f32 %v2604, %v2615
      %v2620 = vadd.f32 %v2605, %v2615
      %v2621 = vadd.f32 %v2606, %v2615
      %v2622 = vadd.f32 %v2607, %v2615
      %v2623 = vadd.f32 %v2608, %v2615
      %v2624 = vadd.f32 %v2609, %v2615
      %vm2625 = vcmp.gt.f32.partialorder %v2617, 0.0
      %vm2626 = vcmp.gt.f32.partialorder %v2618, 0.0
      %vm2627 = vcmp.gt.f32.partialorder %v2619, 0.0
      %vm2628 = vcmp.gt.f32.partialorder %v2620, 0.0
      %vm2629 = vcmp.gt.f32.partialorder %v2621, 0.0
      %vm2630 = vcmp.gt.f32.partialorder %v2622, 0.0
      %vm2631 = vcmp.gt.f32.partialorder %v2623, 0.0
      %vm2632 = vcmp.gt.f32.partialorder %v2624, 0.0
      %v2633 = vmul.f32 %v2617, 1.442695
      %v2634 = vpow.pop %v2633
      %v2635 = vmul.f32 %v2618, 1.442695
      %v2636 = vpow.pop %v2635
      %v2637 = vmul.f32 %v2619, 1.442695
      %v2638 = vpow.pop %v2637
      %v2639 = vmul.f32 %v2620, 1.442695
      %v2640 = vpow.pop %v2639
      %v2641 = vmul.f32 %v2621, 1.442695
      %v2642 = vpow.pop %v2641
      %v2643 = vmul.f32 %v2622, 1.442695
      %v2644 = vpow.pop %v2643
      %v2645 = vmul.f32 %v2623, 1.442695
      %v2646 = vpow.pop %v2645
      %v2647 = vmul.f32 %v2624, 1.442695
      %v2648 = vpow.pop %v2647
      %v2649 = vsub.f32 %v2634, 1.0
      %v2650 = vsub.f32 %v2636, 1.0
      %v2651 = vsub.f32 %v2638, 1.0
      %v2652 = vsub.f32 %v2640, 1.0
      %v2653 = vsub.f32 %v2642, 1.0
      %v2654 = vsub.f32 %v2644, 1.0
      %v2655 = vsub.f32 %v2646, 1.0
      %v2656 = vsub.f32 %v2648, 1.0
      %v2657 = vsel %vm2625, %v2617, %v2649
      %v2658 = vsel %vm2626, %v2618, %v2650
      %v2659 = vsel %vm2627, %v2619, %v2651
      %v2660 = vsel %vm2628, %v2620, %v2652
      %v2661 = vsel %vm2629, %v2621, %v2653
      %v2662 = vsel %vm2630, %v2622, %v2654
      %v2663 = vsel %vm2631, %v2623, %v2655
      %v2664 = vsel %vm2632, %v2624, %v2656
      %v2665 = vld [vmem:[%s10] sm:$0xff]
      %v2666 = vld [vmem:[%s10 + $0x8] sm:$0xff]
      %v2667 = vld [vmem:[%s10 + $0x10] sm:$0xff]
      %v2668 = vld [vmem:[%s10 + $0x18] sm:$0xff]
      %v2669 = vld [vmem:[%s11] sm:$0x1]
      %v2671 = vlaneseq
      %v2672 = vshrl.u32 %v2671, 7
      %v2673 = vsub.s32 0, %v2672
      %v2674 = vrot.slane %v2669, %v2673
      %v2677 = vsel %vm648, %v2657, 0
      %v2680 = vsel %vm648, %v2658, 0
      %v2683 = vsel %vm648, %v2659, 0
      %v2686 = vsel %vm648, %v2660, 0
      %v2689 = vsel %vm648, %v2661, 0
      %v2692 = vsel %vm648, %v2662, 0
      %v2695 = vsel %vm648, %v2663, 0
      %v2698 = vsel %vm648, %v2664, 0
      %2700 = vmatprep.subr.mxu0 0.0
      %2701 = vmatpush1.msra.mxu0 %v2665
      %2702 = vmatprep.subr.mxu0 0.0
      %2703 = vmatpush1.msra.mxu0 %v2666
      %2704 = vmatprep.subr.mxu0 0.0
      %2705 = vmatpush1.msra.mxu0 %v2667
      %2706 = vmatprep.subr.mxu0 0.0
      %2707 = vmatpush1.msra.mxu0 %v2668
      %2708 = vmatprep.subr.mxu0 0.0
      %2709 = vmatpush1.msra.mxu0 0.0
      %2710 = vmatprep.subr.mxu0 0.0
      %2711 = vmatpush1.msra.mxu0 0.0
      %2712 = vmatprep.subr.mxu0 0.0
      %2713 = vmatpush1.msra.mxu0 0.0
      %2714 = vmatprep.subr.mxu0 0.0
      %2715 = vmatpush1.msra.mxu0 0.0
      %2716 = vmatprep.subr.mxu0 0.0
      %2717 = vmatpush1.msra.mxu0 0.0
      %2718 = vmatprep.subr.mxu0 0.0
      %2719 = vmatpush1.msra.mxu0 0.0
      %2720 = vmatprep.subr.mxu0 0.0
      %2721 = vmatpush1.msra.mxu0 0.0
      %2722 = vmatprep.subr.mxu0 0.0
      %2723 = vmatpush1.msra.mxu0 0.0
      %2724 = vmatprep.subr.mxu0 0.0
      %2725 = vmatpush1.msra.mxu0 0.0
      %2726 = vmatprep.subr.mxu0 0.0
      %2727 = vmatpush1.msra.mxu0 0.0
      %2728 = vmatprep.subr.mxu0 0.0
      %2729 = vmatpush1.msra.mxu0 0.0
      %2730 = vmatprep.subr.mxu0 0.0
      %2731 = vmatpush1.msra.mxu0 0.0
      %2732 = vmatprep.subr.mxu0 0.0
      %2733 = vmatpush1.msra.mxu0 0.0
      %2734 = vmatprep.subr.mxu0 0.0
      %2735 = vmatpush1.msra.mxu0 0.0
      %2736 = vmatprep.subr.mxu0 0.0
      %2737 = vmatpush1.msra.mxu0 0.0
      %2738 = vmatprep.subr.mxu0 0.0
      %2739 = vmatpush1.msra.mxu0 0.0
      %2740 = vmatprep.subr.mxu0 0.0
      %2741 = vmatpush1.msra.mxu0 0.0
      %2742 = vmatprep.subr.mxu0 0.0
      %2743 = vmatpush1.msra.mxu0 0.0
      %2744 = vmatprep.subr.mxu0 0.0
      %2745 = vmatpush1.msra.mxu0 0.0
      %2746 = vmatprep.subr.mxu0 0.0
      %2747 = vmatpush1.msra.mxu0 0.0
      %2748 = vmatprep.subr.mxu0 0.0
      %2749 = vmatpush1.msra.mxu0 0.0
      %2750 = vmatprep.subr.mxu0 0.0
      %2751 = vmatpush1.msra.mxu0 0.0
      %2752 = vmatprep.subr.mxu0 0.0
      %2753 = vmatpush1.msra.mxu0 0.0
      %2754 = vmatprep.subr.mxu0 0.0
      %2755 = vmatpush1.msra.mxu0 0.0
      %2756 = vmatprep.subr.mxu0 0.0
      %2757 = vmatpush1.msra.mxu0 0.0
      %2758 = vmatprep.subr.mxu0 0.0
      %2759 = vmatpush1.msra.mxu0 0.0
      %2760 = vmatprep.subr.mxu0 0.0
      %2761 = vmatpush1.msra.mxu0 0.0
      %2762 = vmatprep.subr.mxu0 0.0
      %2763 = vmatpush1.msra.mxu0 0.0
      %2764 = vmatprep.mubr.f32.mxu0 0.0
      %2765 = vmatmul.mubr.f32.gmra.mrb[0].mxu0 %v2677
      %v2766 = vpop.f32.mrb[0].mxu0
      %v2767 = vadd.f32 %v2674, %v2766
      %v2768 = vpop.f32.mrb[0].mxu0
      %2769 = vmatprep.mubr.f32.mxu0 0.0
      %2770 = vmatmul.mubr.f32.gmra.mrb[0].mxu0 %v2680
      %v2771 = vpop.f32.mrb[0].mxu0
      %v2772 = vadd.f32 %v2674, %v2771
      %v2773 = vpop.f32.mrb[0].mxu0
      %2774 = vmatprep.mubr.f32.mxu0 0.0
      %2775 = vmatmul.mubr.f32.gmra.mrb[0].mxu0 %v2683
      %v2776 = vpop.f32.mrb[0].mxu0
      %v2777 = vadd.f32 %v2674, %v2776
      %v2778 = vpop.f32.mrb[0].mxu0
      %2779 = vmatprep.mubr.f32.mxu0 0.0
      %2780 = vmatmul.mubr.f32.gmra.mrb[0].mxu0 %v2686
      %v2781 = vpop.f32.mrb[0].mxu0
      %v2782 = vadd.f32 %v2674, %v2781
      %v2783 = vpop.f32.mrb[0].mxu0
      %2784 = vmatprep.mubr.f32.mxu0 0.0
      %2785 = vmatmul.mubr.f32.gmra.mrb[0].mxu0 %v2689
      %v2786 = vpop.f32.mrb[0].mxu0
      %v2787 = vadd.f32 %v2674, %v2786
      %v2788 = vpop.f32.mrb[0].mxu0
      %2789 = vmatprep.mubr.f32.mxu0 0.0
      %2790 = vmatmul.mubr.f32.gmra.mrb[0].mxu0 %v2692
      %v2791 = vpop.f32.mrb[0].mxu0
      %v2792 = vadd.f32 %v2674, %v2791
      %v2793 = vpop.f32.mrb[0].mxu0
      %2794 = vmatprep.mubr.f32.mxu0 0.0
      %2795 = vmatmul.mubr.f32.gmra.mrb[0].mxu0 %v2695
      %v2796 = vpop.f32.mrb[0].mxu0
      %v2797 = vadd.f32 %v2674, %v2796
      %v2798 = vpop.f32.mrb[0].mxu0
      %2799 = vmatprep.mubr.f32.mxu0 0.0
      %2800 = vmatmul.mubr.f32.gmra.mrb[0].mxu0 %v2698
      %v2801 = vpop.f32.mrb[0].mxu0
      %v2802 = vadd.f32 %v2674, %v2801
      %v2803 = vpop.f32.mrb[0].mxu0
      %2804 = vdwg.mxu0
      %vm2805 = vcmask 64512
      %2806 = vst.msk [vmem:[%s433] sm:$0xff] %vm2805, %v2767
      %2807 = vst.msk [vmem:[%s433 + $0x8] sm:$0xff] %vm2805, %v2772
      %2808 = vst.msk [vmem:[%s433 + $0x10] sm:$0xff] %vm2805, %v2777
      %2809 = vst.msk [vmem:[%s433 + $0x18] sm:$0xff] %vm2805, %v2782
      %2810 = vst.msk [vmem:[%s433 + $0x20] sm:$0xff] %vm2805, %v2787
      %2811 = vst.msk [vmem:[%s433 + $0x28] sm:$0xff] %vm2805, %v2792
      %2812 = vst.msk [vmem:[%s433 + $0x30] sm:$0xff] %vm2805, %v2797
      %2813 = vst.msk [vmem:[%s433 + $0x38] sm:$0xff] %vm2805, %v2802
      %p2814 = scmp.lt.s32.totalorder %s23, 1
      %s2815 = scalar_select %p2814, %s23, 1
      %s2816 = smul.addr %s2815, 8
      %s2817 = smul.addr %s2816, 8
      %s2818 = scalar_lea.vmem %s12, %s2817
      // Predicated region
      $region69: #{tpu_custom_call.1} parent=67 // pred_check
        %p2819 = pneg %p303
      $region70: #{tpu_custom_call.1} parent=67 // pred_check_branch
        %2821 = sbr.rel (%p2819) target = $region72
      $region71: #{tpu_custom_call.1} parent=67 // pred_region
        _
      $region72: #{tpu_custom_call.1} parent=67 // pred_fallthru
        _
    $region68: #{tpu_custom_call.1} parent=5 // pred_fallthru
      _
    %p2822 = scmp.le.s32.totalorder 2, %s18
    // Predicated region
    $region73: #{tpu_custom_call.1} parent=5 // pred_check
      %p2823 = pneg %p2822
    $region74: #{tpu_custom_call.1} parent=5 // pred_check_branch
      %2825 = sbr.rel (%p2823) target = $region76
    $region75: #{tpu_custom_call.1} parent=5 // pred_region
      %s2826 = ssub.s32 %s18, 2
      // Predicated region
      $region77: #{tpu_custom_call.1} parent=75 // pred_check
        %p2827 = pneg %p309
      $region78: #{tpu_custom_call.1} parent=75 // pred_check_branch
        %2829 = sbr.rel (%p2827) target = $region80
      $region79: #{tpu_custom_call.1} parent=75 // pred_region
        %p2830 = scmp.lt.s32.totalorder %s24, 1
        %s2831 = scalar_select %p2830, %s24, 1
        %s2832 = smul.addr %s2831, 8
        %s2833 = smul.addr %s2832, 8
        %s2834 = scalar_lea.vmem %s12, %s2833
      $region80: #{tpu_custom_call.1} parent=75 // pred_fallthru
        _
    $region76: #{tpu_custom_call.1} parent=5 // pred_fallthru
      _
  $region6: #{tpu_custom_call.1} parent=0 // loop_footer
    %s22 = sadd.s32 1, %s18
  $region7: #{tpu_custom_call.1} parent=0 // loop_footer_branch
    %17 = sbr.rel target = $region3
  $region8: #{tpu_custom_call.1} parent=0 // loop_exit
    _

</llo_original>
